<compile_context>
chip_gen: v7x
topology: tpu7x:2x2x1
jax: 0.10.0
libtpu: 0.0.40
codegen_flags: <defaults>
</compile_context>

<pallas_src>
import functools

import jax
import jax.numpy as jnp
from jax import lax
from jax.experimental import pallas as pl
from jax.experimental.pallas import tpu as pltpu

_STATIC_UNROLL_MAX_SEQ = 16   # beyond this, use fori_loop to bound live ranges


# -----------------------------------------------------------------------------
# Fused Pallas kernel: num_layers x LSTM + Linear head, all VMEM-resident.
# -----------------------------------------------------------------------------
def _lstm_fused_kernel(*refs, num_layers, hidden_size, seq_len, batch):
    """refs = (x, [w_ih, w_hh, b]*L, fc_w, fc_b, out, gates_scr, hseq_scr)

    x:         (S*B, D)    f32   time-major flattened input
    w_ih:      (D_l, 4H)   bf16  input->gates weights (g-gate cols pre-scaled x2)
    w_hh:      (H, 4H)     bf16  hidden->gates weights (g-gate cols pre-scaled x2)
    b:         (1, 4H)     f32   combined b_ih+b_hh   (g-gate cols pre-scaled x2)
    fc_w:      (H, O)      bf16  linear head weight (transposed)
    fc_b:      (1, O)      f32   linear head bias
    out:       (B, O)      f32   model output
    gates_scr: (S*B, 4H)   f32   VMEM scratch: hoisted input projection
    hseq_scr:  (S*B, H)    f32   VMEM scratch: inter-layer hidden sequence
    """
    H, S, B = hidden_size, seq_len, batch

    x_ref = refs[0]
    layer_refs = refs[1:1 + 3 * num_layers]
    fc_w_ref = refs[1 + 3 * num_layers]
    fc_b_ref = refs[2 + 3 * num_layers]
    o_ref = refs[3 + 3 * num_layers]
    gates_scr = refs[4 + 3 * num_layers]
    hseq_scr = refs[5 + 3 * num_layers]

    h = jnp.zeros((B, H), jnp.float32)
    for l in range(num_layers):
        w_ih_ref = layer_refs[3 * l + 0]
        w_hh_ref = layer_refs[3 * l + 1]
        b_ref = layer_refs[3 * l + 2]
        last_layer = (l == num_layers - 1)

        # Hoisted input projection: all timesteps in ONE bf16 MXU matmul,
        # parked in VMEM so only a (B, 4H) slice is live per recurrence step.
        inp = (x_ref[...] if l == 0 else hseq_scr[...]).astype(jnp.bfloat16)
        gates_scr[...] = (
            jnp.dot(inp, w_ih_ref[...], preferred_element_type=jnp.float32)
            + b_ref[...])

        w_hh = w_hh_ref[...]                      # bf16 (H, 4H), loaded once

        def step(h, c, row):
            # Serial critical path per step: 1 bf16 MXU dot + 2 EUP pushes.
            g = gates_scr[pl.ds(row, B), :] + jnp.dot(
                h.astype(jnp.bfloat16), w_hh,
                preferred_element_type=jnp.float32)            # (B, 4H) f32
            sig = jax.nn.sigmoid(g)               # single full-vreg EUP push
            i_g = sig[:, 0 * H:1 * H]
            f_g = sig[:, 1 * H:2 * H]
            g_g = 2.0 * sig[:, 2 * H:3 * H] - 1.0  # tanh(pre): cols pre-scaled x2
            o_g = sig[:, 3 * H:4 * H]
            c = f_g * c + i_g * g_g
            h = o_g * jnp.tanh(c)                 # second (and last) EUP push
            if not last_layer:                    # inner layers feed next layer
                hseq_scr[pl.ds(row, B), :] = h
            return h, c

        h = jnp.zeros((B, H), jnp.float32)
        c = jnp.zeros((B, H), jnp.float32)
        if S <= _STATIC_UNROLL_MAX_SEQ:
            # Small S: fully unrolled at trace time, static row offsets.
            for t in range(S):
                h, c = step(h, c, t * B)
        else:
            # Larger S: visible loop with partial unroll bounds vreg live ranges.
            def body(t, carry):
                hh, cc = carry
                return step(hh, cc, pl.multiple_of(t * B, B))
            h, c = lax.fori_loop(0, S, body, (h, c), unroll=8)

    # Fused FC head on the last layer's final hidden state.
    o_ref[...] = (jnp.dot(h.astype(jnp.bfloat16), fc_w_ref[...],
                          preferred_element_type=jnp.float32) + fc_b_ref[...])


# -----------------------------------------------------------------------------
# Wrapper
# -----------------------------------------------------------------------------
def _prepare_kernel_params(params, hidden_size):
    """Kernel-ready params: g-gate columns x2 (tanh-from-sigmoid identity),
    matmul operands cast to bf16, biases kept f32."""
    H = hidden_size
    scale = jnp.ones((4 * H,), jnp.float32).at[2 * H:3 * H].set(2.0)
    lstm = []
    for (w_ih_t, w_hh_t, bias) in params["lstm"]:
        lstm.append(((w_ih_t * scale).astype(jnp.bfloat16),
                     (w_hh_t * scale).astype(jnp.bfloat16),
                     (bias * scale).astype(jnp.float32)))
    return lstm, params["fc_w_t"].astype(jnp.bfloat16), params["fc_b"].astype(jnp.float32)


def lstm_model_forward(x, params, hidden_size):
    """Full LSTMModel forward. x: (B, S, input_size) batch-first -> (B, O)."""
    B, S, D = x.shape
    H = hidden_size
    lstm, fc_w, fc_b = _prepare_kernel_params(params, hidden_size)
    num_layers = len(lstm)
    O = fc_w.shape[1]

    # Time-major, flattened so each timestep is a sublane-aligned row block.
    x_tm = jnp.transpose(x, (1, 0, 2)).reshape(S * B, D).astype(jnp.float32)

    inputs = [x_tm]
    for (w_ih_t, w_hh_t, bias) in lstm:
        inputs += [w_ih_t, w_hh_t, bias]
    inputs += [fc_w, fc_b]

    full_block = lambda: (0, 0)  # grid=(): everything 2D and fully VMEM-resident
    in_specs = [pl.BlockSpec(a.shape, full_block) for a in inputs]

    kernel = functools.partial(
        _lstm_fused_kernel,
        num_layers=num_layers, hidden_size=H, seq_len=S, batch=B)

    # VMEM budget with headroom (re-derived for v7x: 64 MiB physical,
    # 32 MiB scoped default): inputs + output + both scratches.
    data_bytes = sum(int(a.size) * a.dtype.itemsize for a in inputs)
    data_bytes += S * B * 4 * H * 4 + S * B * H * 4 + B * O * 4
    vmem_limit = int(min(48 * 1024 * 1024, max(4 * data_bytes, 8 * 1024 * 1024)))

    return pl.pallas_call(
        kernel,
        out_shape=jax.ShapeDtypeStruct((B, O), jnp.float32),
        grid=(),
        in_specs=in_specs,
        out_specs=pl.BlockSpec((B, O), full_block),
        scratch_shapes=[pltpu.VMEM((S * B, 4 * H), jnp.float32),
                        pltpu.VMEM((S * B, H), jnp.float32)],
        compiler_params=pltpu.CompilerParams(vmem_limit_bytes=vmem_limit),
    )(*inputs)


# -----------------------------------------------------------------------------
# Deterministic parameter init (PyTorch nn.LSTM/nn.Linear shapes, uniform(-k, k))
# -----------------------------------------------------------------------------
def init_params(key, input_size, hidden_size, num_layers, output_size):
    k = 1.0 / jnp.sqrt(jnp.float32(hidden_size))
    params = {"lstm": []}
    for layer in range(num_layers):
        in_dim = input_size if layer == 0 else hidden_size
        key, k1, k2, k3, k4 = jax.random.split(key, 5)
        w_ih = jax.random.uniform(k1, (4 * hidden_size, in_dim), jnp.float32, -k, k)
        w_hh = jax.random.uniform(k2, (4 * hidden_size, hidden_size), jnp.float32, -k, k)
        b_ih = jax.random.uniform(k3, (4 * hidden_size,), jnp.float32, -k, k)
        b_hh = jax.random.uniform(k4, (4 * hidden_size,), jnp.float32, -k, k)
        params["lstm"].append(
            (w_ih.T, w_hh.T, (b_ih + b_hh).reshape(1, 4 * hidden_size)))
    key, k5, k6 = jax.random.split(key, 3)
    kf = 1.0 / jnp.sqrt(jnp.float32(hidden_size))
    fc_w = jax.random.uniform(k5, (output_size, hidden_size), jnp.float32, -kf, kf)
    fc_b = jax.random.uniform(k6, (output_size,), jnp.float32, -kf, kf)
    params["fc_w_t"] = fc_w.T
    params["fc_b"] = fc_b.reshape(1, output_size)
    return params


# -----------------------------------------------------------------------------
# Pure-JAX f32 reference (PyTorch semantics) for correctness check
# -----------------------------------------------------------------------------
def lstm_model_reference(x, params, hidden_size):
    H = hidden_size
    h_seq = jnp.transpose(x, (1, 0, 2))  # (S, B, D)
    B = x.shape[0]
    for (w_ih_t, w_hh_t, bias) in params["lstm"]:
        def step(carry, x_t):
            hp, cp = carry
            gates = x_t @ w_ih_t + hp @ w_hh_t + bias
            i_g = jax.nn.sigmoid(gates[:, :H])
            f_g = jax.nn.sigmoid(gates[:, H:2 * H])
            g_g = jnp.tanh(gates[:, 2 * H:3 * H])
            o_g = jax.nn.sigmoid(gates[:, 3 * H:])
            c = f_g * cp + i_g * g_g
            hn = o_g * jnp.tanh(c)
            return (hn, c), hn
        (_, _), h_seq = lax.scan(
            step, (jnp.zeros((B, H)), jnp.zeros((B, H))), h_seq)
    return h_seq[-1] @ params["fc_w_t"] + params["fc_b"]


# -----------------------------------------------------------------------------
if __name__ == "__main__":
    input_size, hidden_size, num_layers, dropout, output_size = 16, 32, 2, 0.0, 1
    batch, seq = 8, 8

    key = jax.random.PRNGKey(0)
    key, xkey = jax.random.split(key)
    x = jax.random.normal(xkey, (batch, seq, input_size), jnp.float32)
    params = init_params(key, input_size, hidden_size, num_layers, output_size)

    out = jax.jit(lambda x: lstm_model_forward(x, params, hidden_size))(x)
    out = jax.block_until_ready(out)

    ref = lstm_model_reference(x, params, hidden_size)
    assert out.shape == (batch, output_size), out.shape
    # bf16 MXU operands (f32 accumulate / elementwise) => looser tolerance than
    # the pure-f32 reference, as anticipated in the perf review.
    assert jnp.allclose(out, ref, atol=2e-2, rtol=2e-2), (out, ref)

    print("KERNEL_OK")
</pallas_src>

<mosaic_0001>
module attributes {stable_mosaic.version = 11 : i64} {
  func.func @_lstm_fused_kernel(%arg0: memref<64x16xf32, #tpu.memory_space<vmem>>, %arg1: memref<16x128xbf16, #tpu.memory_space<vmem>>, %arg2: memref<32x128xbf16, #tpu.memory_space<vmem>>, %arg3: memref<1x128xf32, #tpu.memory_space<vmem>>, %arg4: memref<32x128xbf16, #tpu.memory_space<vmem>>, %arg5: memref<32x128xbf16, #tpu.memory_space<vmem>>, %arg6: memref<1x128xf32, #tpu.memory_space<vmem>>, %arg7: memref<32x1xbf16, #tpu.memory_space<vmem>>, %arg8: memref<1x1xf32, #tpu.memory_space<vmem>>, %arg9: memref<8x1xf32, #tpu.memory_space<vmem>>, %arg10: memref<64x128xf32, #tpu.memory_space<vmem>>, %arg11: memref<64x32xf32, #tpu.memory_space<vmem>>) attributes {dimension_semantics = [], scalar_prefetch = 0 : i64, scratch_operands = 2 : i64, tpu.core_type = #tpu.core_type<tc>} {
    %c0 = arith.constant 0 : index
    %c0_0 = arith.constant 0 : index
    %0 = vector.load %arg0[%c0, %c0_0] : memref<64x16xf32, #tpu.memory_space<vmem>>, vector<64x16xf32>
    %1 = arith.truncf %0 : vector<64x16xf32> to vector<64x16xbf16>
    %c0_1 = arith.constant 0 : index
    %c0_2 = arith.constant 0 : index
    %2 = vector.load %arg1[%c0_1, %c0_2] : memref<16x128xbf16, #tpu.memory_space<vmem>>, vector<16x128xbf16>
    %cst = arith.constant dense<0.000000e+00> : vector<64x128xf32>
    %3 = tpu.matmul %1, %2, %cst {dimension_numbers = #tpu.dot_dimension_numbers<[1], [0], [0], [1], [0, 0, 1, 1], [], []>} : vector<64x16xbf16>, vector<16x128xbf16>, vector<64x128xf32> -> vector<64x128xf32>
    %c0_3 = arith.constant 0 : index
    %c0_4 = arith.constant 0 : index
    %4 = vector.load %arg3[%c0_3, %c0_4] : memref<1x128xf32, #tpu.memory_space<vmem>>, vector<1x128xf32>
    %5 = vector.broadcast %4 : vector<1x128xf32> to vector<64x128xf32>
    %6 = arith.addf %3, %5 : vector<64x128xf32>
    %c0_5 = arith.constant 0 : index
    %c0_6 = arith.constant 0 : index
    %7 = vector.load %arg10[%c0_5, %c0_6] : memref<64x128xf32, #tpu.memory_space<vmem>>, vector<64x128xf32>
    tpu.vector_store %arg10[%c0_5, %c0_6], %6 {strides = array<i32>} : memref<64x128xf32, #tpu.memory_space<vmem>>, vector<64x128xf32>,
    %c0_7 = arith.constant 0 : index
    %c0_8 = arith.constant 0 : index
    %8 = vector.load %arg2[%c0_7, %c0_8] : memref<32x128xbf16, #tpu.memory_space<vmem>>, vector<32x128xbf16>
    %cst_9 = arith.constant 0.000000e+00 : f32
    %9 = vector.broadcast %cst_9 : f32 to vector<8x32xf32>
    %cst_10 = arith.constant 0.000000e+00 : f32
    %10 = vector.broadcast %cst_10 : f32 to vector<8x32xf32>
    %c0_11 = arith.constant 0 : index
    %c0_12 = arith.constant 0 : index
    %11 = vector.load %arg10[%c0_11, %c0_12] : memref<64x128xf32, #tpu.memory_space<vmem>>, vector<8x128xf32>
    %12 = arith.truncf %9 : vector<8x32xf32> to vector<8x32xbf16>
    %cst_13 = arith.constant dense<0.000000e+00> : vector<8x128xf32>
    %13 = tpu.matmul %12, %8, %cst_13 {dimension_numbers = #tpu.dot_dimension_numbers<[1], [0], [0], [1], [0, 0, 1, 1], [], []>} : vector<8x32xbf16>, vector<32x128xbf16>, vector<8x128xf32> -> vector<8x128xf32>
    %14 = arith.addf %11, %13 : vector<8x128xf32>
    %15 = arith.negf %14 : vector<8x128xf32>
    %16 = math.exp %15 : vector<8x128xf32>
    %cst_14 = arith.constant 1.000000e+00 : f32
    %17 = vector.broadcast %cst_14 : f32 to vector<8x128xf32>
    %18 = arith.addf %17, %16 : vector<8x128xf32>
    %19 = arith.divf %17, %18 : vector<8x128xf32>
    %20 = vector.extract_strided_slice %19 {offsets = [0, 0], sizes = [8, 32], strides = [1, 1]} : vector<8x128xf32> to vector<8x32xf32>
    %21 = vector.extract_strided_slice %19 {offsets = [0, 32], sizes = [8, 32], strides = [1, 1]} : vector<8x128xf32> to vector<8x32xf32>
    %22 = vector.extract_strided_slice %19 {offsets = [0, 64], sizes = [8, 32], strides = [1, 1]} : vector<8x128xf32> to vector<8x32xf32>
    %cst_15 = arith.constant 2.000000e+00 : f32
    %23 = vector.broadcast %cst_15 : f32 to vector<8x32xf32>
    %24 = arith.mulf %23, %22 : vector<8x32xf32>
    %cst_16 = arith.constant 1.000000e+00 : f32
    %25 = vector.broadcast %cst_16 : f32 to vector<8x32xf32>
    %26 = arith.subf %24, %25 : vector<8x32xf32>
    %27 = vector.extract_strided_slice %19 {offsets = [0, 96], sizes = [8, 32], strides = [1, 1]} : vector<8x128xf32> to vector<8x32xf32>
    %28 = arith.mulf %21, %10 : vector<8x32xf32>
    %29 = arith.mulf %20, %26 : vector<8x32xf32>
    %30 = arith.addf %28, %29 : vector<8x32xf32>
    %31 = math.tanh %30 : vector<8x32xf32>
    %32 = arith.mulf %27, %31 : vector<8x32xf32>
    %c0_17 = arith.constant 0 : index
    %c0_18 = arith.constant 0 : index
    %33 = vector.load %arg11[%c0_17, %c0_18] : memref<64x32xf32, #tpu.memory_space<vmem>>, vector<8x32xf32>
    tpu.vector_store %arg11[%c0_17, %c0_18], %32 {strides = array<i32>} : memref<64x32xf32, #tpu.memory_space<vmem>>, vector<8x32xf32>,
    %c8 = arith.constant 8 : index
    %c0_19 = arith.constant 0 : index
    %34 = vector.load %arg10[%c8, %c0_19] : memref<64x128xf32, #tpu.memory_space<vmem>>, vector<8x128xf32>
    %35 = arith.truncf %32 : vector<8x32xf32> to vector<8x32xbf16>
    %cst_20 = arith.constant dense<0.000000e+00> : vector<8x128xf32>
    %36 = tpu.matmul %35, %8, %cst_20 {dimension_numbers = #tpu.dot_dimension_numbers<[1], [0], [0], [1], [0, 0, 1, 1], [], []>} : vector<8x32xbf16>, vector<32x128xbf16>, vector<8x128xf32> -> vector<8x128xf32>
    %37 = arith.addf %34, %36 : vector<8x128xf32>
    %38 = arith.negf %37 : vector<8x128xf32>
    %39 = math.exp %38 : vector<8x128xf32>
    %cst_21 = arith.constant 1.000000e+00 : f32
    %40 = vector.broadcast %cst_21 : f32 to vector<8x128xf32>
    %41 = arith.addf %40, %39 : vector<8x128xf32>
    %42 = arith.divf %40, %41 : vector<8x128xf32>
    %43 = vector.extract_strided_slice %42 {offsets = [0, 0], sizes = [8, 32], strides = [1, 1]} : vector<8x128xf32> to vector<8x32xf32>
    %44 = vector.extract_strided_slice %42 {offsets = [0, 32], sizes = [8, 32], strides = [1, 1]} : vector<8x128xf32> to vector<8x32xf32>
    %45 = vector.extract_strided_slice %42 {offsets = [0, 64], sizes = [8, 32], strides = [1, 1]} : vector<8x128xf32> to vector<8x32xf32>
    %cst_22 = arith.constant 2.000000e+00 : f32
    %46 = vector.broadcast %cst_22 : f32 to vector<8x32xf32>
    %47 = arith.mulf %46, %45 : vector<8x32xf32>
    %cst_23 = arith.constant 1.000000e+00 : f32
    %48 = vector.broadcast %cst_23 : f32 to vector<8x32xf32>
    %49 = arith.subf %47, %48 : vector<8x32xf32>
    %50 = vector.extract_strided_slice %42 {offsets = [0, 96], sizes = [8, 32], strides = [1, 1]} : vector<8x128xf32> to vector<8x32xf32>
    %51 = arith.mulf %44, %30 : vector<8x32xf32>
    %52 = arith.mulf %43, %49 : vector<8x32xf32>
    %53 = arith.addf %51, %52 : vector<8x32xf32>
    %54 = math.tanh %53 : vector<8x32xf32>
    %55 = arith.mulf %50, %54 : vector<8x32xf32>
    %c8_24 = arith.constant 8 : index
    %c0_25 = arith.constant 0 : index
    %56 = vector.load %arg11[%c8_24, %c0_25] : memref<64x32xf32, #tpu.memory_space<vmem>>, vector<8x32xf32>
    tpu.vector_store %arg11[%c8_24, %c0_25], %55 {strides = array<i32>} : memref<64x32xf32, #tpu.memory_space<vmem>>, vector<8x32xf32>,
    %c16 = arith.constant 16 : index
    %c0_26 = arith.constant 0 : index
    %57 = vector.load %arg10[%c16, %c0_26] : memref<64x128xf32, #tpu.memory_space<vmem>>, vector<8x128xf32>
    %58 = arith.truncf %55 : vector<8x32xf32> to vector<8x32xbf16>
    %cst_27 = arith.constant dense<0.000000e+00> : vector<8x128xf32>
    %59 = tpu.matmul %58, %8, %cst_27 {dimension_numbers = #tpu.dot_dimension_numbers<[1], [0], [0], [1], [0, 0, 1, 1], [], []>} : vector<8x32xbf16>, vector<32x128xbf16>, vector<8x128xf32> -> vector<8x128xf32>
    %60 = arith.addf %57, %59 : vector<8x128xf32>
    %61 = arith.negf %60 : vector<8x128xf32>
    %62 = math.exp %61 : vector<8x128xf32>
    %cst_28 = arith.constant 1.000000e+00 : f32
    %63 = vector.broadcast %cst_28 : f32 to vector<8x128xf32>
    %64 = arith.addf %63, %62 : vector<8x128xf32>
    %65 = arith.divf %63, %64 : vector<8x128xf32>
    %66 = vector.extract_strided_slice %65 {offsets = [0, 0], sizes = [8, 32], strides = [1, 1]} : vector<8x128xf32> to vector<8x32xf32>
    %67 = vector.extract_strided_slice %65 {offsets = [0, 32], sizes = [8, 32], strides = [1, 1]} : vector<8x128xf32> to vector<8x32xf32>
    %68 = vector.extract_strided_slice %65 {offsets = [0, 64], sizes = [8, 32], strides = [1, 1]} : vector<8x128xf32> to vector<8x32xf32>
    %cst_29 = arith.constant 2.000000e+00 : f32
    %69 = vector.broadcast %cst_29 : f32 to vector<8x32xf32>
    %70 = arith.mulf %69, %68 : vector<8x32xf32>
    %cst_30 = arith.constant 1.000000e+00 : f32
    %71 = vector.broadcast %cst_30 : f32 to vector<8x32xf32>
    %72 = arith.subf %70, %71 : vector<8x32xf32>
    %73 = vector.extract_strided_slice %65 {offsets = [0, 96], sizes = [8, 32], strides = [1, 1]} : vector<8x128xf32> to vector<8x32xf32>
    %74 = arith.mulf %67, %53 : vector<8x32xf32>
    %75 = arith.mulf %66, %72 : vector<8x32xf32>
    %76 = arith.addf %74, %75 : vector<8x32xf32>
    %77 = math.tanh %76 : vector<8x32xf32>
    %78 = arith.mulf %73, %77 : vector<8x32xf32>
    %c16_31 = arith.constant 16 : index
    %c0_32 = arith.constant 0 : index
    %79 = vector.load %arg11[%c16_31, %c0_32] : memref<64x32xf32, #tpu.memory_space<vmem>>, vector<8x32xf32>
    tpu.vector_store %arg11[%c16_31, %c0_32], %78 {strides = array<i32>} : memref<64x32xf32, #tpu.memory_space<vmem>>, vector<8x32xf32>,
    %c24 = arith.constant 24 : index
    %c0_33 = arith.constant 0 : index
    %80 = vector.load %arg10[%c24, %c0_33] : memref<64x128xf32, #tpu.memory_space<vmem>>, vector<8x128xf32>
    %81 = arith.truncf %78 : vector<8x32xf32> to vector<8x32xbf16>
    %cst_34 = arith.constant dense<0.000000e+00> : vector<8x128xf32>
    %82 = tpu.matmul %81, %8, %cst_34 {dimension_numbers = #tpu.dot_dimension_numbers<[1], [0], [0], [1], [0, 0, 1, 1], [], []>} : vector<8x32xbf16>, vector<32x128xbf16>, vector<8x128xf32> -> vector<8x128xf32>
    %83 = arith.addf %80, %82 : vector<8x128xf32>
    %84 = arith.negf %83 : vector<8x128xf32>
    %85 = math.exp %84 : vector<8x128xf32>
    %cst_35 = arith.constant 1.000000e+00 : f32
    %86 = vector.broadcast %cst_35 : f32 to vector<8x128xf32>
    %87 = arith.addf %86, %85 : vector<8x128xf32>
    %88 = arith.divf %86, %87 : vector<8x128xf32>
    %89 = vector.extract_strided_slice %88 {offsets = [0, 0], sizes = [8, 32], strides = [1, 1]} : vector<8x128xf32> to vector<8x32xf32>
    %90 = vector.extract_strided_slice %88 {offsets = [0, 32], sizes = [8, 32], strides = [1, 1]} : vector<8x128xf32> to vector<8x32xf32>
    %91 = vector.extract_strided_slice %88 {offsets = [0, 64], sizes = [8, 32], strides = [1, 1]} : vector<8x128xf32> to vector<8x32xf32>
    %cst_36 = arith.constant 2.000000e+00 : f32
    %92 = vector.broadcast %cst_36 : f32 to vector<8x32xf32>
    %93 = arith.mulf %92, %91 : vector<8x32xf32>
    %cst_37 = arith.constant 1.000000e+00 : f32
    %94 = vector.broadcast %cst_37 : f32 to vector<8x32xf32>
    %95 = arith.subf %93, %94 : vector<8x32xf32>
    %96 = vector.extract_strided_slice %88 {offsets = [0, 96], sizes = [8, 32], strides = [1, 1]} : vector<8x128xf32> to vector<8x32xf32>
    %97 = arith.mulf %90, %76 : vector<8x32xf32>
    %98 = arith.mulf %89, %95 : vector<8x32xf32>
    %99 = arith.addf %97, %98 : vector<8x32xf32>
    %100 = math.tanh %99 : vector<8x32xf32>
    %101 = arith.mulf %96, %100 : vector<8x32xf32>
    %c24_38 = arith.constant 24 : index
    %c0_39 = arith.constant 0 : index
    %102 = vector.load %arg11[%c24_38, %c0_39] : memref<64x32xf32, #tpu.memory_space<vmem>>, vector<8x32xf32>
    tpu.vector_store %arg11[%c24_38, %c0_39], %101 {strides = array<i32>} : memref<64x32xf32, #tpu.memory_space<vmem>>, vector<8x32xf32>,
    %c32 = arith.constant 32 : index
    %c0_40 = arith.constant 0 : index
    %103 = vector.load %arg10[%c32, %c0_40] : memref<64x128xf32, #tpu.memory_space<vmem>>, vector<8x128xf32>
    %104 = arith.truncf %101 : vector<8x32xf32> to vector<8x32xbf16>
    %cst_41 = arith.constant dense<0.000000e+00> : vector<8x128xf32>
    %105 = tpu.matmul %104, %8, %cst_41 {dimension_numbers = #tpu.dot_dimension_numbers<[1], [0], [0], [1], [0, 0, 1, 1], [], []>} : vector<8x32xbf16>, vector<32x128xbf16>, vector<8x128xf32> -> vector<8x128xf32>
    %106 = arith.addf %103, %105 : vector<8x128xf32>
    %107 = arith.negf %106 : vector<8x128xf32>
    %108 = math.exp %107 : vector<8x128xf32>
    %cst_42 = arith.constant 1.000000e+00 : f32
    %109 = vector.broadcast %cst_42 : f32 to vector<8x128xf32>
    %110 = arith.addf %109, %108 : vector<8x128xf32>
    %111 = arith.divf %109, %110 : vector<8x128xf32>
    %112 = vector.extract_strided_slice %111 {offsets = [0, 0], sizes = [8, 32], strides = [1, 1]} : vector<8x128xf32> to vector<8x32xf32>
    %113 = vector.extract_strided_slice %111 {offsets = [0, 32], sizes = [8, 32], strides = [1, 1]} : vector<8x128xf32> to vector<8x32xf32>
    %114 = vector.extract_strided_slice %111 {offsets = [0, 64], sizes = [8, 32], strides = [1, 1]} : vector<8x128xf32> to vector<8x32xf32>
    %cst_43 = arith.constant 2.000000e+00 : f32
    %115 = vector.broadcast %cst_43 : f32 to vector<8x32xf32>
    %116 = arith.mulf %115, %114 : vector<8x32xf32>
    %cst_44 = arith.constant 1.000000e+00 : f32
    %117 = vector.broadcast %cst_44 : f32 to vector<8x32xf32>
    %118 = arith.subf %116, %117 : vector<8x32xf32>
    %119 = vector.extract_strided_slice %111 {offsets = [0, 96], sizes = [8, 32], strides = [1, 1]} : vector<8x128xf32> to vector<8x32xf32>
    %120 = arith.mulf %113, %99 : vector<8x32xf32>
    %121 = arith.mulf %112, %118 : vector<8x32xf32>
    %122 = arith.addf %120, %121 : vector<8x32xf32>
    %123 = math.tanh %122 : vector<8x32xf32>
    %124 = arith.mulf %119, %123 : vector<8x32xf32>
    %c32_45 = arith.constant 32 : index
    %c0_46 = arith.constant 0 : index
    %125 = vector.load %arg11[%c32_45, %c0_46] : memref<64x32xf32, #tpu.memory_space<vmem>>, vector<8x32xf32>
    tpu.vector_store %arg11[%c32_45, %c0_46], %124 {strides = array<i32>} : memref<64x32xf32, #tpu.memory_space<vmem>>, vector<8x32xf32>,
    %c40 = arith.constant 40 : index
    %c0_47 = arith.constant 0 : index
    %126 = vector.load %arg10[%c40, %c0_47] : memref<64x128xf32, #tpu.memory_space<vmem>>, vector<8x128xf32>
    %127 = arith.truncf %124 : vector<8x32xf32> to vector<8x32xbf16>
    %cst_48 = arith.constant dense<0.000000e+00> : vector<8x128xf32>
    %128 = tpu.matmul %127, %8, %cst_48 {dimension_numbers = #tpu.dot_dimension_numbers<[1], [0], [0], [1], [0, 0, 1, 1], [], []>} : vector<8x32xbf16>, vector<32x128xbf16>, vector<8x128xf32> -> vector<8x128xf32>
    %129 = arith.addf %126, %128 : vector<8x128xf32>
    %130 = arith.negf %129 : vector<8x128xf32>
    %131 = math.exp %130 : vector<8x128xf32>
    %cst_49 = arith.constant 1.000000e+00 : f32
    %132 = vector.broadcast %cst_49 : f32 to vector<8x128xf32>
    %133 = arith.addf %132, %131 : vector<8x128xf32>
    %134 = arith.divf %132, %133 : vector<8x128xf32>
    %135 = vector.extract_strided_slice %134 {offsets = [0, 0], sizes = [8, 32], strides = [1, 1]} : vector<8x128xf32> to vector<8x32xf32>
    %136 = vector.extract_strided_slice %134 {offsets = [0, 32], sizes = [8, 32], strides = [1, 1]} : vector<8x128xf32> to vector<8x32xf32>
    %137 = vector.extract_strided_slice %134 {offsets = [0, 64], sizes = [8, 32], strides = [1, 1]} : vector<8x128xf32> to vector<8x32xf32>
    %cst_50 = arith.constant 2.000000e+00 : f32
    %138 = vector.broadcast %cst_50 : f32 to vector<8x32xf32>
    %139 = arith.mulf %138, %137 : vector<8x32xf32>
    %cst_51 = arith.constant 1.000000e+00 : f32
    %140 = vector.broadcast %cst_51 : f32 to vector<8x32xf32>
    %141 = arith.subf %139, %140 : vector<8x32xf32>
    %142 = vector.extract_strided_slice %134 {offsets = [0, 96], sizes = [8, 32], strides = [1, 1]} : vector<8x128xf32> to vector<8x32xf32>
    %143 = arith.mulf %136, %122 : vector<8x32xf32>
    %144 = arith.mulf %135, %141 : vector<8x32xf32>
    %145 = arith.addf %143, %144 : vector<8x32xf32>
    %146 = math.tanh %145 : vector<8x32xf32>
    %147 = arith.mulf %142, %146 : vector<8x32xf32>
    %c40_52 = arith.constant 40 : index
    %c0_53 = arith.constant 0 : index
    %148 = vector.load %arg11[%c40_52, %c0_53] : memref<64x32xf32, #tpu.memory_space<vmem>>, vector<8x32xf32>
    tpu.vector_store %arg11[%c40_52, %c0_53], %147 {strides = array<i32>} : memref<64x32xf32, #tpu.memory_space<vmem>>, vector<8x32xf32>,
    %c48 = arith.constant 48 : index
    %c0_54 = arith.constant 0 : index
    %149 = vector.load %arg10[%c48, %c0_54] : memref<64x128xf32, #tpu.memory_space<vmem>>, vector<8x128xf32>
    %150 = arith.truncf %147 : vector<8x32xf32> to vector<8x32xbf16>
    %cst_55 = arith.constant dense<0.000000e+00> : vector<8x128xf32>
    %151 = tpu.matmul %150, %8, %cst_55 {dimension_numbers = #tpu.dot_dimension_numbers<[1], [0], [0], [1], [0, 0, 1, 1], [], []>} : vector<8x32xbf16>, vector<32x128xbf16>, vector<8x128xf32> -> vector<8x128xf32>
    %152 = arith.addf %149, %151 : vector<8x128xf32>
    %153 = arith.negf %152 : vector<8x128xf32>
    %154 = math.exp %153 : vector<8x128xf32>
    %cst_56 = arith.constant 1.000000e+00 : f32
    %155 = vector.broadcast %cst_56 : f32 to vector<8x128xf32>
    %156 = arith.addf %155, %154 : vector<8x128xf32>
    %157 = arith.divf %155, %156 : vector<8x128xf32>
    %158 = vector.extract_strided_slice %157 {offsets = [0, 0], sizes = [8, 32], strides = [1, 1]} : vector<8x128xf32> to vector<8x32xf32>
    %159 = vector.extract_strided_slice %157 {offsets = [0, 32], sizes = [8, 32], strides = [1, 1]} : vector<8x128xf32> to vector<8x32xf32>
    %160 = vector.extract_strided_slice %157 {offsets = [0, 64], sizes = [8, 32], strides = [1, 1]} : vector<8x128xf32> to vector<8x32xf32>
    %cst_57 = arith.constant 2.000000e+00 : f32
    %161 = vector.broadcast %cst_57 : f32 to vector<8x32xf32>
    %162 = arith.mulf %161, %160 : vector<8x32xf32>
    %cst_58 = arith.constant 1.000000e+00 : f32
    %163 = vector.broadcast %cst_58 : f32 to vector<8x32xf32>
    %164 = arith.subf %162, %163 : vector<8x32xf32>
    %165 = vector.extract_strided_slice %157 {offsets = [0, 96], sizes = [8, 32], strides = [1, 1]} : vector<8x128xf32> to vector<8x32xf32>
    %166 = arith.mulf %159, %145 : vector<8x32xf32>
    %167 = arith.mulf %158, %164 : vector<8x32xf32>
    %168 = arith.addf %166, %167 : vector<8x32xf32>
    %169 = math.tanh %168 : vector<8x32xf32>
    %170 = arith.mulf %165, %169 : vector<8x32xf32>
    %c48_59 = arith.constant 48 : index
    %c0_60 = arith.constant 0 : index
    %171 = vector.load %arg11[%c48_59, %c0_60] : memref<64x32xf32, #tpu.memory_space<vmem>>, vector<8x32xf32>
    tpu.vector_store %arg11[%c48_59, %c0_60], %170 {strides = array<i32>} : memref<64x32xf32, #tpu.memory_space<vmem>>, vector<8x32xf32>,
    %c56 = arith.constant 56 : index
    %c0_61 = arith.constant 0 : index
    %172 = vector.load %arg10[%c56, %c0_61] : memref<64x128xf32, #tpu.memory_space<vmem>>, vector<8x128xf32>
    %173 = arith.truncf %170 : vector<8x32xf32> to vector<8x32xbf16>
    %cst_62 = arith.constant dense<0.000000e+00> : vector<8x128xf32>
    %174 = tpu.matmul %173, %8, %cst_62 {dimension_numbers = #tpu.dot_dimension_numbers<[1], [0], [0], [1], [0, 0, 1, 1], [], []>} : vector<8x32xbf16>, vector<32x128xbf16>, vector<8x128xf32> -> vector<8x128xf32>
    %175 = arith.addf %172, %174 : vector<8x128xf32>
    %176 = arith.negf %175 : vector<8x128xf32>
    %177 = math.exp %176 : vector<8x128xf32>
    %cst_63 = arith.constant 1.000000e+00 : f32
    %178 = vector.broadcast %cst_63 : f32 to vector<8x128xf32>
    %179 = arith.addf %178, %177 : vector<8x128xf32>
    %180 = arith.divf %178, %179 : vector<8x128xf32>
    %181 = vector.extract_strided_slice %180 {offsets = [0, 0], sizes = [8, 32], strides = [1, 1]} : vector<8x128xf32> to vector<8x32xf32>
    %182 = vector.extract_strided_slice %180 {offsets = [0, 32], sizes = [8, 32], strides = [1, 1]} : vector<8x128xf32> to vector<8x32xf32>
    %183 = vector.extract_strided_slice %180 {offsets = [0, 64], sizes = [8, 32], strides = [1, 1]} : vector<8x128xf32> to vector<8x32xf32>
    %cst_64 = arith.constant 2.000000e+00 : f32
    %184 = vector.broadcast %cst_64 : f32 to vector<8x32xf32>
    %185 = arith.mulf %184, %183 : vector<8x32xf32>
    %cst_65 = arith.constant 1.000000e+00 : f32
    %186 = vector.broadcast %cst_65 : f32 to vector<8x32xf32>
    %187 = arith.subf %185, %186 : vector<8x32xf32>
    %188 = vector.extract_strided_slice %180 {offsets = [0, 96], sizes = [8, 32], strides = [1, 1]} : vector<8x128xf32> to vector<8x32xf32>
    %189 = arith.mulf %182, %168 : vector<8x32xf32>
    %190 = arith.mulf %181, %187 : vector<8x32xf32>
    %191 = arith.addf %189, %190 : vector<8x32xf32>
    %192 = math.tanh %191 : vector<8x32xf32>
    %193 = arith.mulf %188, %192 : vector<8x32xf32>
    %c56_66 = arith.constant 56 : index
    %c0_67 = arith.constant 0 : index
    %194 = vector.load %arg11[%c56_66, %c0_67] : memref<64x32xf32, #tpu.memory_space<vmem>>, vector<8x32xf32>
    tpu.vector_store %arg11[%c56_66, %c0_67], %193 {strides = array<i32>} : memref<64x32xf32, #tpu.memory_space<vmem>>, vector<8x32xf32>,
    %c0_68 = arith.constant 0 : index
    %c0_69 = arith.constant 0 : index
    %195 = vector.load %arg11[%c0_68, %c0_69] : memref<64x32xf32, #tpu.memory_space<vmem>>, vector<64x32xf32>
    %196 = arith.truncf %195 : vector<64x32xf32> to vector<64x32xbf16>
    %c0_70 = arith.constant 0 : index
    %c0_71 = arith.constant 0 : index
    %197 = vector.load %arg4[%c0_70, %c0_71] : memref<32x128xbf16, #tpu.memory_space<vmem>>, vector<32x128xbf16>
    %cst_72 = arith.constant dense<0.000000e+00> : vector<64x128xf32>
    %198 = tpu.matmul %196, %197, %cst_72 {dimension_numbers = #tpu.dot_dimension_numbers<[1], [0], [0], [1], [0, 0, 1, 1], [], []>} : vector<64x32xbf16>, vector<32x128xbf16>, vector<64x128xf32> -> vector<64x128xf32>
    %c0_73 = arith.constant 0 : index
    %c0_74 = arith.constant 0 : index
    %199 = vector.load %arg6[%c0_73, %c0_74] : memref<1x128xf32, #tpu.memory_space<vmem>>, vector<1x128xf32>
    %200 = vector.broadcast %199 : vector<1x128xf32> to vector<64x128xf32>
    %201 = arith.addf %198, %200 : vector<64x128xf32>
    %c0_75 = arith.constant 0 : index
    %c0_76 = arith.constant 0 : index
    %202 = vector.load %arg10[%c0_75, %c0_76] : memref<64x128xf32, #tpu.memory_space<vmem>>, vector<64x128xf32>
    tpu.vector_store %arg10[%c0_75, %c0_76], %201 {strides = array<i32>} : memref<64x128xf32, #tpu.memory_space<vmem>>, vector<64x128xf32>,
    %c0_77 = arith.constant 0 : index
    %c0_78 = arith.constant 0 : index
    %203 = vector.load %arg5[%c0_77, %c0_78] : memref<32x128xbf16, #tpu.memory_space<vmem>>, vector<32x128xbf16>
    %cst_79 = arith.constant 0.000000e+00 : f32
    %204 = vector.broadcast %cst_79 : f32 to vector<8x32xf32>
    %cst_80 = arith.constant 0.000000e+00 : f32
    %205 = vector.broadcast %cst_80 : f32 to vector<8x32xf32>
    %c0_81 = arith.constant 0 : index
    %c0_82 = arith.constant 0 : index
    %206 = vector.load %arg10[%c0_81, %c0_82] : memref<64x128xf32, #tpu.memory_space<vmem>>, vector<8x128xf32>
    %207 = arith.truncf %204 : vector<8x32xf32> to vector<8x32xbf16>
    %cst_83 = arith.constant dense<0.000000e+00> : vector<8x128xf32>
    %208 = tpu.matmul %207, %203, %cst_83 {dimension_numbers = #tpu.dot_dimension_numbers<[1], [0], [0], [1], [0, 0, 1, 1], [], []>} : vector<8x32xbf16>, vector<32x128xbf16>, vector<8x128xf32> -> vector<8x128xf32>
    %209 = arith.addf %206, %208 : vector<8x128xf32>
    %210 = arith.negf %209 : vector<8x128xf32>
    %211 = math.exp %210 : vector<8x128xf32>
    %cst_84 = arith.constant 1.000000e+00 : f32
    %212 = vector.broadcast %cst_84 : f32 to vector<8x128xf32>
    %213 = arith.addf %212, %211 : vector<8x128xf32>
    %214 = arith.divf %212, %213 : vector<8x128xf32>
    %215 = vector.extract_strided_slice %214 {offsets = [0, 0], sizes = [8, 32], strides = [1, 1]} : vector<8x128xf32> to vector<8x32xf32>
    %216 = vector.extract_strided_slice %214 {offsets = [0, 32], sizes = [8, 32], strides = [1, 1]} : vector<8x128xf32> to vector<8x32xf32>
    %217 = vector.extract_strided_slice %214 {offsets = [0, 64], sizes = [8, 32], strides = [1, 1]} : vector<8x128xf32> to vector<8x32xf32>
    %cst_85 = arith.constant 2.000000e+00 : f32
    %218 = vector.broadcast %cst_85 : f32 to vector<8x32xf32>
    %219 = arith.mulf %218, %217 : vector<8x32xf32>
    %cst_86 = arith.constant 1.000000e+00 : f32
    %220 = vector.broadcast %cst_86 : f32 to vector<8x32xf32>
    %221 = arith.subf %219, %220 : vector<8x32xf32>
    %222 = vector.extract_strided_slice %214 {offsets = [0, 96], sizes = [8, 32], strides = [1, 1]} : vector<8x128xf32> to vector<8x32xf32>
    %223 = arith.mulf %216, %205 : vector<8x32xf32>
    %224 = arith.mulf %215, %221 : vector<8x32xf32>
    %225 = arith.addf %223, %224 : vector<8x32xf32>
    %226 = math.tanh %225 : vector<8x32xf32>
    %227 = arith.mulf %222, %226 : vector<8x32xf32>
    %c8_87 = arith.constant 8 : index
    %c0_88 = arith.constant 0 : index
    %228 = vector.load %arg10[%c8_87, %c0_88] : memref<64x128xf32, #tpu.memory_space<vmem>>, vector<8x128xf32>
    %229 = arith.truncf %227 : vector<8x32xf32> to vector<8x32xbf16>
    %cst_89 = arith.constant dense<0.000000e+00> : vector<8x128xf32>
    %230 = tpu.matmul %229, %203, %cst_89 {dimension_numbers = #tpu.dot_dimension_numbers<[1], [0], [0], [1], [0, 0, 1, 1], [], []>} : vector<8x32xbf16>, vector<32x128xbf16>, vector<8x128xf32> -> vector<8x128xf32>
    %231 = arith.addf %228, %230 : vector<8x128xf32>
    %232 = arith.negf %231 : vector<8x128xf32>
    %233 = math.exp %232 : vector<8x128xf32>
    %cst_90 = arith.constant 1.000000e+00 : f32
    %234 = vector.broadcast %cst_90 : f32 to vector<8x128xf32>
    %235 = arith.addf %234, %233 : vector<8x128xf32>
    %236 = arith.divf %234, %235 : vector<8x128xf32>
    %237 = vector.extract_strided_slice %236 {offsets = [0, 0], sizes = [8, 32], strides = [1, 1]} : vector<8x128xf32> to vector<8x32xf32>
    %238 = vector.extract_strided_slice %236 {offsets = [0, 32], sizes = [8, 32], strides = [1, 1]} : vector<8x128xf32> to vector<8x32xf32>
    %239 = vector.extract_strided_slice %236 {offsets = [0, 64], sizes = [8, 32], strides = [1, 1]} : vector<8x128xf32> to vector<8x32xf32>
    %cst_91 = arith.constant 2.000000e+00 : f32
    %240 = vector.broadcast %cst_91 : f32 to vector<8x32xf32>
    %241 = arith.mulf %240, %239 : vector<8x32xf32>
    %cst_92 = arith.constant 1.000000e+00 : f32
    %242 = vector.broadcast %cst_92 : f32 to vector<8x32xf32>
    %243 = arith.subf %241, %242 : vector<8x32xf32>
    %244 = vector.extract_strided_slice %236 {offsets = [0, 96], sizes = [8, 32], strides = [1, 1]} : vector<8x128xf32> to vector<8x32xf32>
    %245 = arith.mulf %238, %225 : vector<8x32xf32>
    %246 = arith.mulf %237, %243 : vector<8x32xf32>
    %247 = arith.addf %245, %246 : vector<8x32xf32>
    %248 = math.tanh %247 : vector<8x32xf32>
    %249 = arith.mulf %244, %248 : vector<8x32xf32>
    %c16_93 = arith.constant 16 : index
    %c0_94 = arith.constant 0 : index
    %250 = vector.load %arg10[%c16_93, %c0_94] : memref<64x128xf32, #tpu.memory_space<vmem>>, vector<8x128xf32>
    %251 = arith.truncf %249 : vector<8x32xf32> to vector<8x32xbf16>
    %cst_95 = arith.constant dense<0.000000e+00> : vector<8x128xf32>
    %252 = tpu.matmul %251, %203, %cst_95 {dimension_numbers = #tpu.dot_dimension_numbers<[1], [0], [0], [1], [0, 0, 1, 1], [], []>} : vector<8x32xbf16>, vector<32x128xbf16>, vector<8x128xf32> -> vector<8x128xf32>
    %253 = arith.addf %250, %252 : vector<8x128xf32>
    %254 = arith.negf %253 : vector<8x128xf32>
    %255 = math.exp %254 : vector<8x128xf32>
    %cst_96 = arith.constant 1.000000e+00 : f32
    %256 = vector.broadcast %cst_96 : f32 to vector<8x128xf32>
    %257 = arith.addf %256, %255 : vector<8x128xf32>
    %258 = arith.divf %256, %257 : vector<8x128xf32>
    %259 = vector.extract_strided_slice %258 {offsets = [0, 0], sizes = [8, 32], strides = [1, 1]} : vector<8x128xf32> to vector<8x32xf32>
    %260 = vector.extract_strided_slice %258 {offsets = [0, 32], sizes = [8, 32], strides = [1, 1]} : vector<8x128xf32> to vector<8x32xf32>
    %261 = vector.extract_strided_slice %258 {offsets = [0, 64], sizes = [8, 32], strides = [1, 1]} : vector<8x128xf32> to vector<8x32xf32>
    %cst_97 = arith.constant 2.000000e+00 : f32
    %262 = vector.broadcast %cst_97 : f32 to vector<8x32xf32>
    %263 = arith.mulf %262, %261 : vector<8x32xf32>
    %cst_98 = arith.constant 1.000000e+00 : f32
    %264 = vector.broadcast %cst_98 : f32 to vector<8x32xf32>
    %265 = arith.subf %263, %264 : vector<8x32xf32>
    %266 = vector.extract_strided_slice %258 {offsets = [0, 96], sizes = [8, 32], strides = [1, 1]} : vector<8x128xf32> to vector<8x32xf32>
    %267 = arith.mulf %260, %247 : vector<8x32xf32>
    %268 = arith.mulf %259, %265 : vector<8x32xf32>
    %269 = arith.addf %267, %268 : vector<8x32xf32>
    %270 = math.tanh %269 : vector<8x32xf32>
    %271 = arith.mulf %266, %270 : vector<8x32xf32>
    %c24_99 = arith.constant 24 : index
    %c0_100 = arith.constant 0 : index
    %272 = vector.load %arg10[%c24_99, %c0_100] : memref<64x128xf32, #tpu.memory_space<vmem>>, vector<8x128xf32>
    %273 = arith.truncf %271 : vector<8x32xf32> to vector<8x32xbf16>
    %cst_101 = arith.constant dense<0.000000e+00> : vector<8x128xf32>
    %274 = tpu.matmul %273, %203, %cst_101 {dimension_numbers = #tpu.dot_dimension_numbers<[1], [0], [0], [1], [0, 0, 1, 1], [], []>} : vector<8x32xbf16>, vector<32x128xbf16>, vector<8x128xf32> -> vector<8x128xf32>
    %275 = arith.addf %272, %274 : vector<8x128xf32>
    %276 = arith.negf %275 : vector<8x128xf32>
    %277 = math.exp %276 : vector<8x128xf32>
    %cst_102 = arith.constant 1.000000e+00 : f32
    %278 = vector.broadcast %cst_102 : f32 to vector<8x128xf32>
    %279 = arith.addf %278, %277 : vector<8x128xf32>
    %280 = arith.divf %278, %279 : vector<8x128xf32>
    %281 = vector.extract_strided_slice %280 {offsets = [0, 0], sizes = [8, 32], strides = [1, 1]} : vector<8x128xf32> to vector<8x32xf32>
    %282 = vector.extract_strided_slice %280 {offsets = [0, 32], sizes = [8, 32], strides = [1, 1]} : vector<8x128xf32> to vector<8x32xf32>
    %283 = vector.extract_strided_slice %280 {offsets = [0, 64], sizes = [8, 32], strides = [1, 1]} : vector<8x128xf32> to vector<8x32xf32>
    %cst_103 = arith.constant 2.000000e+00 : f32
    %284 = vector.broadcast %cst_103 : f32 to vector<8x32xf32>
    %285 = arith.mulf %284, %283 : vector<8x32xf32>
    %cst_104 = arith.constant 1.000000e+00 : f32
    %286 = vector.broadcast %cst_104 : f32 to vector<8x32xf32>
    %287 = arith.subf %285, %286 : vector<8x32xf32>
    %288 = vector.extract_strided_slice %280 {offsets = [0, 96], sizes = [8, 32], strides = [1, 1]} : vector<8x128xf32> to vector<8x32xf32>
    %289 = arith.mulf %282, %269 : vector<8x32xf32>
    %290 = arith.mulf %281, %287 : vector<8x32xf32>
    %291 = arith.addf %289, %290 : vector<8x32xf32>
    %292 = math.tanh %291 : vector<8x32xf32>
    %293 = arith.mulf %288, %292 : vector<8x32xf32>
    %c32_105 = arith.constant 32 : index
    %c0_106 = arith.constant 0 : index
    %294 = vector.load %arg10[%c32_105, %c0_106] : memref<64x128xf32, #tpu.memory_space<vmem>>, vector<8x128xf32>
    %295 = arith.truncf %293 : vector<8x32xf32> to vector<8x32xbf16>
    %cst_107 = arith.constant dense<0.000000e+00> : vector<8x128xf32>
    %296 = tpu.matmul %295, %203, %cst_107 {dimension_numbers = #tpu.dot_dimension_numbers<[1], [0], [0], [1], [0, 0, 1, 1], [], []>} : vector<8x32xbf16>, vector<32x128xbf16>, vector<8x128xf32> -> vector<8x128xf32>
    %297 = arith.addf %294, %296 : vector<8x128xf32>
    %298 = arith.negf %297 : vector<8x128xf32>
    %299 = math.exp %298 : vector<8x128xf32>
    %cst_108 = arith.constant 1.000000e+00 : f32
    %300 = vector.broadcast %cst_108 : f32 to vector<8x128xf32>
    %301 = arith.addf %300, %299 : vector<8x128xf32>
    %302 = arith.divf %300, %301 : vector<8x128xf32>
    %303 = vector.extract_strided_slice %302 {offsets = [0, 0], sizes = [8, 32], strides = [1, 1]} : vector<8x128xf32> to vector<8x32xf32>
    %304 = vector.extract_strided_slice %302 {offsets = [0, 32], sizes = [8, 32], strides = [1, 1]} : vector<8x128xf32> to vector<8x32xf32>
    %305 = vector.extract_strided_slice %302 {offsets = [0, 64], sizes = [8, 32], strides = [1, 1]} : vector<8x128xf32> to vector<8x32xf32>
    %cst_109 = arith.constant 2.000000e+00 : f32
    %306 = vector.broadcast %cst_109 : f32 to vector<8x32xf32>
    %307 = arith.mulf %306, %305 : vector<8x32xf32>
    %cst_110 = arith.constant 1.000000e+00 : f32
    %308 = vector.broadcast %cst_110 : f32 to vector<8x32xf32>
    %309 = arith.subf %307, %308 : vector<8x32xf32>
    %310 = vector.extract_strided_slice %302 {offsets = [0, 96], sizes = [8, 32], strides = [1, 1]} : vector<8x128xf32> to vector<8x32xf32>
    %311 = arith.mulf %304, %291 : vector<8x32xf32>
    %312 = arith.mulf %303, %309 : vector<8x32xf32>
    %313 = arith.addf %311, %312 : vector<8x32xf32>
    %314 = math.tanh %313 : vector<8x32xf32>
    %315 = arith.mulf %310, %314 : vector<8x32xf32>
    %c40_111 = arith.constant 40 : index
    %c0_112 = arith.constant 0 : index
    %316 = vector.load %arg10[%c40_111, %c0_112] : memref<64x128xf32, #tpu.memory_space<vmem>>, vector<8x128xf32>
    %317 = arith.truncf %315 : vector<8x32xf32> to vector<8x32xbf16>
    %cst_113 = arith.constant dense<0.000000e+00> : vector<8x128xf32>
    %318 = tpu.matmul %317, %203, %cst_113 {dimension_numbers = #tpu.dot_dimension_numbers<[1], [0], [0], [1], [0, 0, 1, 1], [], []>} : vector<8x32xbf16>, vector<32x128xbf16>, vector<8x128xf32> -> vector<8x128xf32>
    %319 = arith.addf %316, %318 : vector<8x128xf32>
    %320 = arith.negf %319 : vector<8x128xf32>
    %321 = math.exp %320 : vector<8x128xf32>
    %cst_114 = arith.constant 1.000000e+00 : f32
    %322 = vector.broadcast %cst_114 : f32 to vector<8x128xf32>
    %323 = arith.addf %322, %321 : vector<8x128xf32>
    %324 = arith.divf %322, %323 : vector<8x128xf32>
    %325 = vector.extract_strided_slice %324 {offsets = [0, 0], sizes = [8, 32], strides = [1, 1]} : vector<8x128xf32> to vector<8x32xf32>
    %326 = vector.extract_strided_slice %324 {offsets = [0, 32], sizes = [8, 32], strides = [1, 1]} : vector<8x128xf32> to vector<8x32xf32>
    %327 = vector.extract_strided_slice %324 {offsets = [0, 64], sizes = [8, 32], strides = [1, 1]} : vector<8x128xf32> to vector<8x32xf32>
    %cst_115 = arith.constant 2.000000e+00 : f32
    %328 = vector.broadcast %cst_115 : f32 to vector<8x32xf32>
    %329 = arith.mulf %328, %327 : vector<8x32xf32>
    %cst_116 = arith.constant 1.000000e+00 : f32
    %330 = vector.broadcast %cst_116 : f32 to vector<8x32xf32>
    %331 = arith.subf %329, %330 : vector<8x32xf32>
    %332 = vector.extract_strided_slice %324 {offsets = [0, 96], sizes = [8, 32], strides = [1, 1]} : vector<8x128xf32> to vector<8x32xf32>
    %333 = arith.mulf %326, %313 : vector<8x32xf32>
    %334 = arith.mulf %325, %331 : vector<8x32xf32>
    %335 = arith.addf %333, %334 : vector<8x32xf32>
    %336 = math.tanh %335 : vector<8x32xf32>
    %337 = arith.mulf %332, %336 : vector<8x32xf32>
    %c48_117 = arith.constant 48 : index
    %c0_118 = arith.constant 0 : index
    %338 = vector.load %arg10[%c48_117, %c0_118] : memref<64x128xf32, #tpu.memory_space<vmem>>, vector<8x128xf32>
    %339 = arith.truncf %337 : vector<8x32xf32> to vector<8x32xbf16>
    %cst_119 = arith.constant dense<0.000000e+00> : vector<8x128xf32>
    %340 = tpu.matmul %339, %203, %cst_119 {dimension_numbers = #tpu.dot_dimension_numbers<[1], [0], [0], [1], [0, 0, 1, 1], [], []>} : vector<8x32xbf16>, vector<32x128xbf16>, vector<8x128xf32> -> vector<8x128xf32>
    %341 = arith.addf %338, %340 : vector<8x128xf32>
    %342 = arith.negf %341 : vector<8x128xf32>
    %343 = math.exp %342 : vector<8x128xf32>
    %cst_120 = arith.constant 1.000000e+00 : f32
    %344 = vector.broadcast %cst_120 : f32 to vector<8x128xf32>
    %345 = arith.addf %344, %343 : vector<8x128xf32>
    %346 = arith.divf %344, %345 : vector<8x128xf32>
    %347 = vector.extract_strided_slice %346 {offsets = [0, 0], sizes = [8, 32], strides = [1, 1]} : vector<8x128xf32> to vector<8x32xf32>
    %348 = vector.extract_strided_slice %346 {offsets = [0, 32], sizes = [8, 32], strides = [1, 1]} : vector<8x128xf32> to vector<8x32xf32>
    %349 = vector.extract_strided_slice %346 {offsets = [0, 64], sizes = [8, 32], strides = [1, 1]} : vector<8x128xf32> to vector<8x32xf32>
    %cst_121 = arith.constant 2.000000e+00 : f32
    %350 = vector.broadcast %cst_121 : f32 to vector<8x32xf32>
    %351 = arith.mulf %350, %349 : vector<8x32xf32>
    %cst_122 = arith.constant 1.000000e+00 : f32
    %352 = vector.broadcast %cst_122 : f32 to vector<8x32xf32>
    %353 = arith.subf %351, %352 : vector<8x32xf32>
    %354 = vector.extract_strided_slice %346 {offsets = [0, 96], sizes = [8, 32], strides = [1, 1]} : vector<8x128xf32> to vector<8x32xf32>
    %355 = arith.mulf %348, %335 : vector<8x32xf32>
    %356 = arith.mulf %347, %353 : vector<8x32xf32>
    %357 = arith.addf %355, %356 : vector<8x32xf32>
    %358 = math.tanh %357 : vector<8x32xf32>
    %359 = arith.mulf %354, %358 : vector<8x32xf32>
    %c56_123 = arith.constant 56 : index
    %c0_124 = arith.constant 0 : index
    %360 = vector.load %arg10[%c56_123, %c0_124] : memref<64x128xf32, #tpu.memory_space<vmem>>, vector<8x128xf32>
    %361 = arith.truncf %359 : vector<8x32xf32> to vector<8x32xbf16>
    %cst_125 = arith.constant dense<0.000000e+00> : vector<8x128xf32>
    %362 = tpu.matmul %361, %203, %cst_125 {dimension_numbers = #tpu.dot_dimension_numbers<[1], [0], [0], [1], [0, 0, 1, 1], [], []>} : vector<8x32xbf16>, vector<32x128xbf16>, vector<8x128xf32> -> vector<8x128xf32>
    %363 = arith.addf %360, %362 : vector<8x128xf32>
    %364 = arith.negf %363 : vector<8x128xf32>
    %365 = math.exp %364 : vector<8x128xf32>
    %cst_126 = arith.constant 1.000000e+00 : f32
    %366 = vector.broadcast %cst_126 : f32 to vector<8x128xf32>
    %367 = arith.addf %366, %365 : vector<8x128xf32>
    %368 = arith.divf %366, %367 : vector<8x128xf32>
    %369 = vector.extract_strided_slice %368 {offsets = [0, 0], sizes = [8, 32], strides = [1, 1]} : vector<8x128xf32> to vector<8x32xf32>
    %370 = vector.extract_strided_slice %368 {offsets = [0, 32], sizes = [8, 32], strides = [1, 1]} : vector<8x128xf32> to vector<8x32xf32>
    %371 = vector.extract_strided_slice %368 {offsets = [0, 64], sizes = [8, 32], strides = [1, 1]} : vector<8x128xf32> to vector<8x32xf32>
    %cst_127 = arith.constant 2.000000e+00 : f32
    %372 = vector.broadcast %cst_127 : f32 to vector<8x32xf32>
    %373 = arith.mulf %372, %371 : vector<8x32xf32>
    %cst_128 = arith.constant 1.000000e+00 : f32
    %374 = vector.broadcast %cst_128 : f32 to vector<8x32xf32>
    %375 = arith.subf %373, %374 : vector<8x32xf32>
    %376 = vector.extract_strided_slice %368 {offsets = [0, 96], sizes = [8, 32], strides = [1, 1]} : vector<8x128xf32> to vector<8x32xf32>
    %377 = arith.mulf %370, %357 : vector<8x32xf32>
    %378 = arith.mulf %369, %375 : vector<8x32xf32>
    %379 = arith.addf %377, %378 : vector<8x32xf32>
    %380 = math.tanh %379 : vector<8x32xf32>
    %381 = arith.mulf %376, %380 : vector<8x32xf32>
    %382 = arith.truncf %381 : vector<8x32xf32> to vector<8x32xbf16>
    %c0_129 = arith.constant 0 : index
    %c0_130 = arith.constant 0 : index
    %383 = vector.load %arg7[%c0_129, %c0_130] : memref<32x1xbf16, #tpu.memory_space<vmem>>, vector<32x1xbf16>
    %cst_131 = arith.constant dense<0.000000e+00> : vector<8x1xf32>
    %384 = tpu.matmul %382, %383, %cst_131 {dimension_numbers = #tpu.dot_dimension_numbers<[1], [0], [0], [1], [0, 0, 1, 1], [], []>} : vector<8x32xbf16>, vector<32x1xbf16>, vector<8x1xf32> -> vector<8x1xf32>
    %c0_132 = arith.constant 0 : index
    %c0_133 = arith.constant 0 : index
    %385 = vector.load %arg8[%c0_132, %c0_133] : memref<1x1xf32, #tpu.memory_space<vmem>>, vector<1x1xf32>
    %386 = vector.broadcast %385 : vector<1x1xf32> to vector<8x1xf32>
    %387 = arith.addf %384, %386 : vector<8x1xf32>
    %c0_134 = arith.constant 0 : index
    %c0_135 = arith.constant 0 : index
    %388 = vector.load %arg9[%c0_134, %c0_135] : memref<8x1xf32, #tpu.memory_space<vmem>>, vector<8x1xf32>
    tpu.vector_store %arg9[%c0_134, %c0_135], %387 {strides = array<i32>} : memref<8x1xf32, #tpu.memory_space<vmem>>, vector<8x1xf32>,
    return
  }
}

</mosaic_0001>

<llo_original>
// kernel: _lambda_.1
$region0: #{_lambda_.1}
  #allocation0 [shape = 'u32[]', space=smem, size = 0x4, offset = 0x4, fixed_abs, tag = 'smem constant byte address 0x4 - core index']
  #allocation1 [shape = 'u32[144,128]{1,0:T(1,128)}', space=vmem, size = 0x12000, scoped, tag = 'internal scratch']
  #allocation2 [shape = 'f32[64,128]{1,0:T(8,128)}', space=vmem, size = 0x8000, scoped, tag = 'scratch operand']
  #allocation3 [shape = 'f32[64,32]{1,0:T(8,128)}', space=vmem, size = 0x8000, scoped, tag = 'scratch operand']
  #allocation4 [shape = 'f32[1,1]{1,0:T(1,128)S(1)}', space=vmem, size = 0x200, scoped, tag = 'scoped memory for _lambda_.1']
  %s0 = inlined_call_operand.vmem [shape: f32[64,16], index: 0, kind: input, shape index: {}]
  %s1 = inlined_call_operand.vmem [shape: bf16[16,128], index: 1, kind: input, shape index: {}]
  %s2 = inlined_call_operand.vmem [shape: bf16[32,128], index: 2, kind: input, shape index: {}]
  %s3 = inlined_call_operand.vmem [shape: f32[1,128], index: 3, kind: input, shape index: {}]
  %s4 = inlined_call_operand.vmem [shape: bf16[32,128], index: 4, kind: input, shape index: {}]
  %s5 = inlined_call_operand.vmem [shape: bf16[32,128], index: 5, kind: input, shape index: {}]
  %s6 = inlined_call_operand.vmem [shape: f32[1,128], index: 6, kind: input, shape index: {}]
  %s7 = inlined_call_operand.vmem [shape: bf16[32,1], index: 7, kind: input, shape index: {}]
  %s8 = inlined_call_operand.<no memory space> [shape: f32[1,1], index: 8, kind: input, shape index: {}]
  %s9 = inlined_call_operand.vmem [shape: f32[8,1], index: 9, kind: output, shape index: {}]
  %s10 = sld [smem:[#allocation0]]
  $region46: #{_lambda_.1} parent=0
    _
  %s12 = ssub.s32 1, %s10
  %s13 = scalar_select 0, %s12, %s10
  %v14 = vstv %s8
  %15 = vst [vmem:[#allocation4] sm:$0x1] %v14
  // Predicated region
  $region2: #{_lambda_.1} parent=0 // pred_check
    _
  $region3: #{_lambda_.1} parent=0 // pred_check_branch
    %17 = sbr.rel (0) target = $region5
  $region4: #{_lambda_.1} parent=0 // pred_region
    _
  $region5: #{_lambda_.1} parent=0 // pred_fallthru
    _
  // Predicated region
  $region6: #{_lambda_.1} parent=0 // pred_check
    _
  $region7: #{_lambda_.1} parent=0 // pred_check_branch
    %19 = sbr.rel (0) target = $region9
  $region8: #{_lambda_.1} parent=0 // pred_region
    _
  $region9: #{_lambda_.1} parent=0 // pred_fallthru
    _
  // Predicated region
  $region10: #{_lambda_.1} parent=0 // pred_check
    _
  $region11: #{_lambda_.1} parent=0 // pred_check_branch
    %21 = sbr.rel (0) target = $region13
  $region12: #{_lambda_.1} parent=0 // pred_region
    _
  $region13: #{_lambda_.1} parent=0 // pred_fallthru
    _
  // Predicated region
  $region14: #{_lambda_.1} parent=0 // pred_check
    _
  $region15: #{_lambda_.1} parent=0 // pred_check_branch
    %23 = sbr.rel (0) target = $region17
  $region16: #{_lambda_.1} parent=0 // pred_region
    _
  $region17: #{_lambda_.1} parent=0 // pred_fallthru
    _
  // Predicated region
  $region18: #{_lambda_.1} parent=0 // pred_check
    _
  $region19: #{_lambda_.1} parent=0 // pred_check_branch
    %25 = sbr.rel (0) target = $region21
  $region20: #{_lambda_.1} parent=0 // pred_region
    _
  $region21: #{_lambda_.1} parent=0 // pred_fallthru
    _
  // Predicated region
  $region22: #{_lambda_.1} parent=0 // pred_check
    _
  $region23: #{_lambda_.1} parent=0 // pred_check_branch
    %27 = sbr.rel (0) target = $region25
  $region24: #{_lambda_.1} parent=0 // pred_region
    _
  $region25: #{_lambda_.1} parent=0 // pred_fallthru
    _
  // Predicated region
  $region26: #{_lambda_.1} parent=0 // pred_check
    _
  $region27: #{_lambda_.1} parent=0 // pred_check_branch
    %29 = sbr.rel (0) target = $region29
  $region28: #{_lambda_.1} parent=0 // pred_region
    _
  $region29: #{_lambda_.1} parent=0 // pred_fallthru
    _
  // Predicated region
  $region30: #{_lambda_.1} parent=0 // pred_check
    _
  $region31: #{_lambda_.1} parent=0 // pred_check_branch
    %31 = sbr.rel (0) target = $region33
  $region32: #{_lambda_.1} parent=0 // pred_region
    _
  $region33: #{_lambda_.1} parent=0 // pred_fallthru
    _
  // Predicated region
  $region34: #{_lambda_.1} parent=0 // pred_check
    _
  $region35: #{_lambda_.1} parent=0 // pred_check_branch
    %33 = sbr.rel (0) target = $region37
  $region36: #{_lambda_.1} parent=0 // pred_region
    _
  $region37: #{_lambda_.1} parent=0 // pred_fallthru
    _
  %v35 = vld [vmem:[%s0] sm:$0xff]
  %v36 = vld [vmem:[%s0 + $0x8] sm:$0xff]
  %v37 = vld [vmem:[%s0 + $0x10] sm:$0xff]
  %v38 = vld [vmem:[%s0 + $0x18] sm:$0xff]
  %v39 = vld [vmem:[%s0 + $0x20] sm:$0xff]
  %v40 = vld [vmem:[%s0 + $0x28] sm:$0xff]
  %v41 = vld [vmem:[%s0 + $0x30] sm:$0xff]
  %v42 = vld [vmem:[%s0 + $0x38] sm:$0xff]
  %v43 = vpack.c.bf16 %v36, %v35
  %v44 = vpack.c.bf16 %v38, %v37
  %v45 = vpack.c.bf16 %v40, %v39
  %v46 = vpack.c.bf16 %v42, %v41
  %v47 = vld [vmem:[%s1] sm:$0xf]
  %v48 = vld [vmem:[%s1 + $0x4] sm:$0xf]
  %v49 = vld [vmem:[%s3] sm:$0x1]
  %v51 = vlaneseq
  %v52 = vshrl.u32 %v51, 7
  %v53 = vsub.s32 0, %v52
  %v54 = vrot.slane %v49, %v53
  %v58 = vunpack.c.l.b16 %v47
  %v59 = vunpack.c.l.b16 %v48
  %v60 = vpack.c.b16 %v59, %v58
  %vm62 = vcmask 130048
  %v64 = vsel %vm62, %v43, 0
  %v67 = vsel %vm62, %v44, 0
  %v70 = vsel %vm62, %v45, 0
  %v73 = vsel %vm62, %v46, 0
  %75 = vmatprep.subr.bf16.mxu0 0
  %76 = vmatpush1.bf16.msra.mxu0 %v60
  %77 = vmatprep.subr.bf16.mxu0 0
  %78 = vmatpush1.bf16.msra.mxu0 0
  %79 = vmatprep.subr.bf16.mxu0 0
  %80 = vmatpush1.bf16.msra.mxu0 0
  %81 = vmatprep.subr.bf16.mxu0 0
  %82 = vmatpush1.bf16.msra.mxu0 0
  %83 = vmatprep.subr.bf16.mxu0 0
  %84 = vmatpush1.bf16.msra.mxu0 0
  %85 = vmatprep.subr.bf16.mxu0 0
  %86 = vmatpush1.bf16.msra.mxu0 0
  %87 = vmatprep.subr.bf16.mxu0 0
  %88 = vmatpush1.bf16.msra.mxu0 0
  %89 = vmatprep.subr.bf16.mxu0 0
  %90 = vmatpush1.bf16.msra.mxu0 0
  %91 = vmatprep.subr.bf16.mxu0 0
  %92 = vmatpush1.bf16.msra.mxu0 0
  %93 = vmatprep.subr.bf16.mxu0 0
  %94 = vmatpush1.bf16.msra.mxu0 0
  %95 = vmatprep.subr.bf16.mxu0 0
  %96 = vmatpush1.bf16.msra.mxu0 0
  %97 = vmatprep.subr.bf16.mxu0 0
  %98 = vmatpush1.bf16.msra.mxu0 0
  %99 = vmatprep.subr.bf16.mxu0 0
  %100 = vmatpush1.bf16.msra.mxu0 0
  %101 = vmatprep.subr.bf16.mxu0 0
  %102 = vmatpush1.bf16.msra.mxu0 0
  %103 = vmatprep.subr.bf16.mxu0 0
  %104 = vmatpush1.bf16.msra.mxu0 0
  %105 = vmatprep.subr.bf16.mxu0 0
  %106 = vmatpush1.bf16.msra.mxu0 0
  %107 = vmatprep.mubr.bf16.mxu0 0
  %108 = vmatmul.mubr.bf16.gmra.mrb[0].mxu0 %v64
  %v109 = vpop.f32.mrb[0].mxu0
  %v110 = vadd.f32 %v54, %v109
  %v111 = vpop.f32.mrb[0].mxu0
  %v112 = vpop.f32.mrb[0].mxu0
  %v113 = vadd.f32 %v54, %v112
  %v114 = vpop.f32.mrb[0].mxu0
  %115 = vmatprep.mubr.bf16.mxu0 0
  %116 = vmatmul.mubr.bf16.gmra.mrb[0].mxu0 %v67
  %v117 = vpop.f32.mrb[0].mxu0
  %v118 = vadd.f32 %v54, %v117
  %v119 = vpop.f32.mrb[0].mxu0
  %v120 = vpop.f32.mrb[0].mxu0
  %v121 = vadd.f32 %v54, %v120
  %v122 = vpop.f32.mrb[0].mxu0
  %123 = vmatprep.mubr.bf16.mxu0 0
  %124 = vmatmul.mubr.bf16.gmra.mrb[0].mxu0 %v70
  %v125 = vpop.f32.mrb[0].mxu0
  %v126 = vadd.f32 %v54, %v125
  %v127 = vpop.f32.mrb[0].mxu0
  %v128 = vpop.f32.mrb[0].mxu0
  %v129 = vadd.f32 %v54, %v128
  %v130 = vpop.f32.mrb[0].mxu0
  %131 = vmatprep.mubr.bf16.mxu0 0
  %132 = vmatmul.mubr.bf16.gmra.mrb[0].mxu0 %v73
  %v133 = vpop.f32.mrb[0].mxu0
  %v134 = vadd.f32 %v54, %v133
  %v135 = vpop.f32.mrb[0].mxu0
  %v136 = vpop.f32.mrb[0].mxu0
  %v137 = vadd.f32 %v54, %v136
  %v138 = vpop.f32.mrb[0].mxu0
  %139 = vdwg.mxu0
  %140 = vst [vmem:[#allocation2] sm:$0xff] %v110
  %141 = vst [vmem:[#allocation2 + $0x8] sm:$0xff] %v113
  %142 = vst [vmem:[#allocation2 + $0x10] sm:$0xff] %v118
  %143 = vst [vmem:[#allocation2 + $0x18] sm:$0xff] %v121
  %144 = vst [vmem:[#allocation2 + $0x20] sm:$0xff] %v126
  %145 = vst [vmem:[#allocation2 + $0x28] sm:$0xff] %v129
  %146 = vst [vmem:[#allocation2 + $0x30] sm:$0xff] %v134
  %147 = vst [vmem:[#allocation2 + $0x38] sm:$0xff] %v137
  %v148 = vld [vmem:[%s2] sm:$0xf]
  %v149 = vld [vmem:[%s2 + $0x4] sm:$0xf]
  %v150 = vld [vmem:[%s2 + $0x8] sm:$0xf]
  %v151 = vld [vmem:[%s2 + $0xc] sm:$0xf]
  %v152 = vld [vmem:[#allocation2] sm:$0xff]
  %v157 = vunpack.c.l.b16 %v148
  %v158 = vunpack.c.l.b16 %v149
  %v159 = vunpack.c.l.b16 %v150
  %v160 = vunpack.c.l.b16 %v151
  %v161 = vpack.c.b16 %v158, %v157
  %v162 = vpack.c.b16 %v160, %v159
  %vm165 = vcmask 261120
  %v167 = vsel %vm165, 0, 0
  %169 = vmatprep.subr.bf16.mxu0 0
  %170 = vmatpush1.bf16.msra.mxu0 %v161
  %171 = vmatprep.subr.bf16.mxu0 0
  %172 = vmatpush1.bf16.msra.mxu0 %v162
  %173 = vmatprep.subr.bf16.mxu0 0
  %174 = vmatpush1.bf16.msra.mxu0 0
  %175 = vmatprep.subr.bf16.mxu0 0
  %176 = vmatpush1.bf16.msra.mxu0 0
  %177 = vmatprep.subr.bf16.mxu0 0
  %178 = vmatpush1.bf16.msra.mxu0 0
  %179 = vmatprep.subr.bf16.mxu0 0
  %180 = vmatpush1.bf16.msra.mxu0 0
  %181 = vmatprep.subr.bf16.mxu0 0
  %182 = vmatpush1.bf16.msra.mxu0 0
  %183 = vmatprep.subr.bf16.mxu0 0
  %184 = vmatpush1.bf16.msra.mxu0 0
  %185 = vmatprep.subr.bf16.mxu0 0
  %186 = vmatpush1.bf16.msra.mxu0 0
  %187 = vmatprep.subr.bf16.mxu0 0
  %188 = vmatpush1.bf16.msra.mxu0 0
  %189 = vmatprep.subr.bf16.mxu0 0
  %190 = vmatpush1.bf16.msra.mxu0 0
  %191 = vmatprep.subr.bf16.mxu0 0
  %192 = vmatpush1.bf16.msra.mxu0 0
  %193 = vmatprep.subr.bf16.mxu0 0
  %194 = vmatpush1.bf16.msra.mxu0 0
  %195 = vmatprep.subr.bf16.mxu0 0
  %196 = vmatpush1.bf16.msra.mxu0 0
  %197 = vmatprep.subr.bf16.mxu0 0
  %198 = vmatpush1.bf16.msra.mxu0 0
  %199 = vmatprep.subr.bf16.mxu0 0
  %200 = vmatpush1.bf16.msra.mxu0 0
  %201 = vmatprep.mubr.bf16.mxu0 0
  %202 = vmatmul.mubr.bf16.gmra.mrb[0].mxu0 %v167
  %v203 = vpop.f32.mrb[0].mxu0
  %v204 = vadd.f32 0.0, %v203
  %v205 = vpop.f32.mrb[0].mxu0
  %v206 = vpop.f32.mrb[0].mxu0
  %v207 = vpop.f32.mrb[0].mxu0
  %208 = vdwg.mxu0
  %v209 = vadd.f32 %v152, %v204
  %v210 = vxor.u32 %v209, 2147483648
  %v211 = vmul.f32 %v210, 1.442695
  %v212 = vpow.pop %v211
  %v213 = vadd.f32 %v212, 1.0
  %v214 = vrcp.pop %v213
  %v215 = vmul.f32 1.0, %v214
  %v216 = vmul.f32 %v215, 2.0
  %v217 = vsub.f32 %v216, 1.0
  %v218 = vmul.f32 %v215, 0.0
  %220 = vrot.lane.b32.xlu0 %v217, 64
  %v221 = vpop.permute.xlu0 %220
  %v223 = vmul.f32 %v215, %v221
  %225 = vrot.lane.b32.xlu0 %v223, 32
  %v226 = vpop.permute.xlu0 %225
  %v228 = vadd.f32 %v218, %v226
  %v229 = vtanh.pop %v228
  %231 = vrot.lane.b32.xlu0 %v229, 64
  %v232 = vpop.permute.xlu0 %231
  %v234 = vmul.f32 %v215, %v232
  %236 = vrot.lane.b32.xlu0 %v234, 32
  %v237 = vpop.permute.xlu0 %236
  %239 = vst.msk [vmem:[#allocation3] sm:$0xff] %vm165, %v237
  %v240 = vld [vmem:[#allocation2 + $0x8] sm:$0xff]
  %v241 = vpack.c.bf16 %v234, %v234
  %243 = vrot.lane.b32.xlu0 %v241, 32
  %v244 = vpop.permute.xlu0 %243
  %v246 = vsel %vm165, %v244, 0
  %248 = vmatprep.subr.bf16.mxu0 0
  %249 = vmatpush1.bf16.msra.mxu0 %v161
  %250 = vmatprep.subr.bf16.mxu0 0
  %251 = vmatpush1.bf16.msra.mxu0 %v162
  %252 = vmatprep.subr.bf16.mxu0 0
  %253 = vmatpush1.bf16.msra.mxu0 0
  %254 = vmatprep.subr.bf16.mxu0 0
  %255 = vmatpush1.bf16.msra.mxu0 0
  %256 = vmatprep.subr.bf16.mxu0 0
  %257 = vmatpush1.bf16.msra.mxu0 0
  %258 = vmatprep.subr.bf16.mxu0 0
  %259 = vmatpush1.bf16.msra.mxu0 0
  %260 = vmatprep.subr.bf16.mxu0 0
  %261 = vmatpush1.bf16.msra.mxu0 0
  %262 = vmatprep.subr.bf16.mxu0 0
  %263 = vmatpush1.bf16.msra.mxu0 0
  %264 = vmatprep.subr.bf16.mxu0 0
  %265 = vmatpush1.bf16.msra.mxu0 0
  %266 = vmatprep.subr.bf16.mxu0 0
  %267 = vmatpush1.bf16.msra.mxu0 0
  %268 = vmatprep.subr.bf16.mxu0 0
  %269 = vmatpush1.bf16.msra.mxu0 0
  %270 = vmatprep.subr.bf16.mxu0 0
  %271 = vmatpush1.bf16.msra.mxu0 0
  %272 = vmatprep.subr.bf16.mxu0 0
  %273 = vmatpush1.bf16.msra.mxu0 0
  %274 = vmatprep.subr.bf16.mxu0 0
  %275 = vmatpush1.bf16.msra.mxu0 0
  %276 = vmatprep.subr.bf16.mxu0 0
  %277 = vmatpush1.bf16.msra.mxu0 0
  %278 = vmatprep.subr.bf16.mxu0 0
  %279 = vmatpush1.bf16.msra.mxu0 0
  %280 = vmatprep.mubr.bf16.mxu0 0
  %281 = vmatmul.mubr.bf16.gmra.mrb[0].mxu0 %v246
  %v282 = vpop.f32.mrb[0].mxu0
  %v283 = vadd.f32 0.0, %v282
  %v284 = vpop.f32.mrb[0].mxu0
  %v285 = vpop.f32.mrb[0].mxu0
  %v286 = vpop.f32.mrb[0].mxu0
  %287 = vdwg.mxu0
  %v288 = vadd.f32 %v240, %v283
  %v289 = vxor.u32 %v288, 2147483648
  %v290 = vmul.f32 %v289, 1.442695
  %v291 = vpow.pop %v290
  %v292 = vadd.f32 %v291, 1.0
  %v293 = vrcp.pop %v292
  %v294 = vmul.f32 1.0, %v293
  %v295 = vmul.f32 %v294, 2.0
  %v296 = vsub.f32 %v295, 1.0
  %v297 = vmul.f32 %v294, %v228
  %299 = vrot.lane.b32.xlu0 %v296, 64
  %v300 = vpop.permute.xlu0 %299
  %v302 = vmul.f32 %v294, %v300
  %304 = vrot.lane.b32.xlu0 %v302, 32
  %v305 = vpop.permute.xlu0 %304
  %v307 = vadd.f32 %v297, %v305
  %v308 = vtanh.pop %v307
  %310 = vrot.lane.b32.xlu0 %v308, 64
  %v311 = vpop.permute.xlu0 %310
  %v313 = vmul.f32 %v294, %v311
  %315 = vrot.lane.b32.xlu0 %v313, 32
  %v316 = vpop.permute.xlu0 %315
  %318 = vst.msk [vmem:[#allocation3 + $0x8] sm:$0xff] %vm165, %v316
  %v319 = vld [vmem:[#allocation2 + $0x10] sm:$0xff]
  %v320 = vpack.c.bf16 %v313, %v313
  %322 = vrot.lane.b32.xlu0 %v320, 32
  %v323 = vpop.permute.xlu0 %322
  %v325 = vsel %vm165, %v323, 0
  %327 = vmatprep.subr.bf16.mxu0 0
  %328 = vmatpush1.bf16.msra.mxu0 %v161
  %329 = vmatprep.subr.bf16.mxu0 0
  %330 = vmatpush1.bf16.msra.mxu0 %v162
  %331 = vmatprep.subr.bf16.mxu0 0
  %332 = vmatpush1.bf16.msra.mxu0 0
  %333 = vmatprep.subr.bf16.mxu0 0
  %334 = vmatpush1.bf16.msra.mxu0 0
  %335 = vmatprep.subr.bf16.mxu0 0
  %336 = vmatpush1.bf16.msra.mxu0 0
  %337 = vmatprep.subr.bf16.mxu0 0
  %338 = vmatpush1.bf16.msra.mxu0 0
  %339 = vmatprep.subr.bf16.mxu0 0
  %340 = vmatpush1.bf16.msra.mxu0 0
  %341 = vmatprep.subr.bf16.mxu0 0
  %342 = vmatpush1.bf16.msra.mxu0 0
  %343 = vmatprep.subr.bf16.mxu0 0
  %344 = vmatpush1.bf16.msra.mxu0 0
  %345 = vmatprep.subr.bf16.mxu0 0
  %346 = vmatpush1.bf16.msra.mxu0 0
  %347 = vmatprep.subr.bf16.mxu0 0
  %348 = vmatpush1.bf16.msra.mxu0 0
  %349 = vmatprep.subr.bf16.mxu0 0
  %350 = vmatpush1.bf16.msra.mxu0 0
  %351 = vmatprep.subr.bf16.mxu0 0
  %352 = vmatpush1.bf16.msra.mxu0 0
  %353 = vmatprep.subr.bf16.mxu0 0
  %354 = vmatpush1.bf16.msra.mxu0 0
  %355 = vmatprep.subr.bf16.mxu0 0
  %356 = vmatpush1.bf16.msra.mxu0 0
  %357 = vmatprep.subr.bf16.mxu0 0
  %358 = vmatpush1.bf16.msra.mxu0 0
  %359 = vmatprep.mubr.bf16.mxu0 0
  %360 = vmatmul.mubr.bf16.gmra.mrb[0].mxu0 %v325
  %v361 = vpop.f32.mrb[0].mxu0
  %v362 = vadd.f32 0.0, %v361
  %v363 = vpop.f32.mrb[0].mxu0
  %v364 = vpop.f32.mrb[0].mxu0
  %v365 = vpop.f32.mrb[0].mxu0
  %366 = vdwg.mxu0
  %v367 = vadd.f32 %v319, %v362
  %v368 = vxor.u32 %v367, 2147483648
  %v369 = vmul.f32 %v368, 1.442695
  %v370 = vpow.pop %v369
  %v371 = vadd.f32 %v370, 1.0
  %v372 = vrcp.pop %v371
  %v373 = vmul.f32 1.0, %v372
  %v374 = vmul.f32 %v373, 2.0
  %v375 = vsub.f32 %v374, 1.0
  %v376 = vmul.f32 %v373, %v307
  %378 = vrot.lane.b32.xlu0 %v375, 64
  %v379 = vpop.permute.xlu0 %378
  %v381 = vmul.f32 %v373, %v379
  %383 = vrot.lane.b32.xlu0 %v381, 32
  %v384 = vpop.permute.xlu0 %383
  %v386 = vadd.f32 %v376, %v384
  %v387 = vtanh.pop %v386
  %389 = vrot.lane.b32.xlu0 %v387, 64
  %v390 = vpop.permute.xlu0 %389
  %v392 = vmul.f32 %v373, %v390
  %394 = vrot.lane.b32.xlu0 %v392, 32
  %v395 = vpop.permute.xlu0 %394
  %397 = vst.msk [vmem:[#allocation3 + $0x10] sm:$0xff] %vm165, %v395
  %v398 = vld [vmem:[#allocation2 + $0x18] sm:$0xff]
  %v399 = vpack.c.bf16 %v392, %v392
  %401 = vrot.lane.b32.xlu0 %v399, 32
  %v402 = vpop.permute.xlu0 %401
  %v404 = vsel %vm165, %v402, 0
  %406 = vmatprep.subr.bf16.mxu0 0
  %407 = vmatpush1.bf16.msra.mxu0 %v161
  %408 = vmatprep.subr.bf16.mxu0 0
  %409 = vmatpush1.bf16.msra.mxu0 %v162
  %410 = vmatprep.subr.bf16.mxu0 0
  %411 = vmatpush1.bf16.msra.mxu0 0
  %412 = vmatprep.subr.bf16.mxu0 0
  %413 = vmatpush1.bf16.msra.mxu0 0
  %414 = vmatprep.subr.bf16.mxu0 0
  %415 = vmatpush1.bf16.msra.mxu0 0
  %416 = vmatprep.subr.bf16.mxu0 0
  %417 = vmatpush1.bf16.msra.mxu0 0
  %418 = vmatprep.subr.bf16.mxu0 0
  %419 = vmatpush1.bf16.msra.mxu0 0
  %420 = vmatprep.subr.bf16.mxu0 0
  %421 = vmatpush1.bf16.msra.mxu0 0
  %422 = vmatprep.subr.bf16.mxu0 0
  %423 = vmatpush1.bf16.msra.mxu0 0
  %424 = vmatprep.subr.bf16.mxu0 0
  %425 = vmatpush1.bf16.msra.mxu0 0
  %426 = vmatprep.subr.bf16.mxu0 0
  %427 = vmatpush1.bf16.msra.mxu0 0
  %428 = vmatprep.subr.bf16.mxu0 0
  %429 = vmatpush1.bf16.msra.mxu0 0
  %430 = vmatprep.subr.bf16.mxu0 0
  %431 = vmatpush1.bf16.msra.mxu0 0
  %432 = vmatprep.subr.bf16.mxu0 0
  %433 = vmatpush1.bf16.msra.mxu0 0
  %434 = vmatprep.subr.bf16.mxu0 0
  %435 = vmatpush1.bf16.msra.mxu0 0
  %436 = vmatprep.subr.bf16.mxu0 0
  %437 = vmatpush1.bf16.msra.mxu0 0
  %438 = vmatprep.mubr.bf16.mxu0 0
  %439 = vmatmul.mubr.bf16.gmra.mrb[0].mxu0 %v404
  %v440 = vpop.f32.mrb[0].mxu0
  %v441 = vadd.f32 0.0, %v440
  %v442 = vpop.f32.mrb[0].mxu0
  %v443 = vpop.f32.mrb[0].mxu0
  %v444 = vpop.f32.mrb[0].mxu0
  %445 = vdwg.mxu0
  %v446 = vadd.f32 %v398, %v441
  %v447 = vxor.u32 %v446, 2147483648
  %v448 = vmul.f32 %v447, 1.442695
  %v449 = vpow.pop %v448
  %v450 = vadd.f32 %v449, 1.0
  %v451 = vrcp.pop %v450
  %v452 = vmul.f32 1.0, %v451
  %v453 = vmul.f32 %v452, 2.0
  %v454 = vsub.f32 %v453, 1.0
  %v455 = vmul.f32 %v452, %v386
  %457 = vrot.lane.b32.xlu0 %v454, 64
  %v458 = vpop.permute.xlu0 %457
  %v460 = vmul.f32 %v452, %v458
  %462 = vrot.lane.b32.xlu0 %v460, 32
  %v463 = vpop.permute.xlu0 %462
  %v465 = vadd.f32 %v455, %v463
  %v466 = vtanh.pop %v465
  %468 = vrot.lane.b32.xlu0 %v466, 64
  %v469 = vpop.permute.xlu0 %468
  %v471 = vmul.f32 %v452, %v469
  %473 = vrot.lane.b32.xlu0 %v471, 32
  %v474 = vpop.permute.xlu0 %473
  %476 = vst.msk [vmem:[#allocation3 + $0x18] sm:$0xff] %vm165, %v474
  %v477 = vld [vmem:[#allocation2 + $0x20] sm:$0xff]
  %v478 = vpack.c.bf16 %v471, %v471
  %480 = vrot.lane.b32.xlu0 %v478, 32
  %v481 = vpop.permute.xlu0 %480
  %v483 = vsel %vm165, %v481, 0
  %485 = vmatprep.subr.bf16.mxu0 0
  %486 = vmatpush1.bf16.msra.mxu0 %v161
  %487 = vmatprep.subr.bf16.mxu0 0
  %488 = vmatpush1.bf16.msra.mxu0 %v162
  %489 = vmatprep.subr.bf16.mxu0 0
  %490 = vmatpush1.bf16.msra.mxu0 0
  %491 = vmatprep.subr.bf16.mxu0 0
  %492 = vmatpush1.bf16.msra.mxu0 0
  %493 = vmatprep.subr.bf16.mxu0 0
  %494 = vmatpush1.bf16.msra.mxu0 0
  %495 = vmatprep.subr.bf16.mxu0 0
  %496 = vmatpush1.bf16.msra.mxu0 0
  %497 = vmatprep.subr.bf16.mxu0 0
  %498 = vmatpush1.bf16.msra.mxu0 0
  %499 = vmatprep.subr.bf16.mxu0 0
  %500 = vmatpush1.bf16.msra.mxu0 0
  %501 = vmatprep.subr.bf16.mxu0 0
  %502 = vmatpush1.bf16.msra.mxu0 0
  %503 = vmatprep.subr.bf16.mxu0 0
  %504 = vmatpush1.bf16.msra.mxu0 0
  %505 = vmatprep.subr.bf16.mxu0 0
  %506 = vmatpush1.bf16.msra.mxu0 0
  %507 = vmatprep.subr.bf16.mxu0 0
  %508 = vmatpush1.bf16.msra.mxu0 0
  %509 = vmatprep.subr.bf16.mxu0 0
  %510 = vmatpush1.bf16.msra.mxu0 0
  %511 = vmatprep.subr.bf16.mxu0 0
  %512 = vmatpush1.bf16.msra.mxu0 0
  %513 = vmatprep.subr.bf16.mxu0 0
  %514 = vmatpush1.bf16.msra.mxu0 0
  %515 = vmatprep.subr.bf16.mxu0 0
  %516 = vmatpush1.bf16.msra.mxu0 0
  %517 = vmatprep.mubr.bf16.mxu0 0
  %518 = vmatmul.mubr.bf16.gmra.mrb[0].mxu0 %v483
  %v519 = vpop.f32.mrb[0].mxu0
  %v520 = vadd.f32 0.0, %v519
  %v521 = vpop.f32.mrb[0].mxu0
  %v522 = vpop.f32.mrb[0].mxu0
  %v523 = vpop.f32.mrb[0].mxu0
  %524 = vdwg.mxu0
  %v525 = vadd.f32 %v477, %v520
  %v526 = vxor.u32 %v525, 2147483648
  %v527 = vmul.f32 %v526, 1.442695
  %v528 = vpow.pop %v527
  %v529 = vadd.f32 %v528, 1.0
  %v530 = vrcp.pop %v529
  %v531 = vmul.f32 1.0, %v530
  %v532 = vmul.f32 %v531, 2.0
  %v533 = vsub.f32 %v532, 1.0
  %v534 = vmul.f32 %v531, %v465
  %536 = vrot.lane.b32.xlu0 %v533, 64
  %v537 = vpop.permute.xlu0 %536
  %v539 = vmul.f32 %v531, %v537
  %541 = vrot.lane.b32.xlu0 %v539, 32
  %v542 = vpop.permute.xlu0 %541
  %v544 = vadd.f32 %v534, %v542
  %v545 = vtanh.pop %v544
  %547 = vrot.lane.b32.xlu0 %v545, 64
  %v548 = vpop.permute.xlu0 %547
  %v550 = vmul.f32 %v531, %v548
  %552 = vrot.lane.b32.xlu0 %v550, 32
  %v553 = vpop.permute.xlu0 %552
  %555 = vst.msk [vmem:[#allocation3 + $0x20] sm:$0xff] %vm165, %v553
  %v556 = vld [vmem:[#allocation2 + $0x28] sm:$0xff]
  %v557 = vpack.c.bf16 %v550, %v550
  %559 = vrot.lane.b32.xlu0 %v557, 32
  %v560 = vpop.permute.xlu0 %559
  %v562 = vsel %vm165, %v560, 0
  %564 = vmatprep.subr.bf16.mxu0 0
  %565 = vmatpush1.bf16.msra.mxu0 %v161
  %566 = vmatprep.subr.bf16.mxu0 0
  %567 = vmatpush1.bf16.msra.mxu0 %v162
  %568 = vmatprep.subr.bf16.mxu0 0
  %569 = vmatpush1.bf16.msra.mxu0 0
  %570 = vmatprep.subr.bf16.mxu0 0
  %571 = vmatpush1.bf16.msra.mxu0 0
  %572 = vmatprep.subr.bf16.mxu0 0
  %573 = vmatpush1.bf16.msra.mxu0 0
  %574 = vmatprep.subr.bf16.mxu0 0
  %575 = vmatpush1.bf16.msra.mxu0 0
  %576 = vmatprep.subr.bf16.mxu0 0
  %577 = vmatpush1.bf16.msra.mxu0 0
  %578 = vmatprep.subr.bf16.mxu0 0
  %579 = vmatpush1.bf16.msra.mxu0 0
  %580 = vmatprep.subr.bf16.mxu0 0
  %581 = vmatpush1.bf16.msra.mxu0 0
  %582 = vmatprep.subr.bf16.mxu0 0
  %583 = vmatpush1.bf16.msra.mxu0 0
  %584 = vmatprep.subr.bf16.mxu0 0
  %585 = vmatpush1.bf16.msra.mxu0 0
  %586 = vmatprep.subr.bf16.mxu0 0
  %587 = vmatpush1.bf16.msra.mxu0 0
  %588 = vmatprep.subr.bf16.mxu0 0
  %589 = vmatpush1.bf16.msra.mxu0 0
  %590 = vmatprep.subr.bf16.mxu0 0
  %591 = vmatpush1.bf16.msra.mxu0 0
  %592 = vmatprep.subr.bf16.mxu0 0
  %593 = vmatpush1.bf16.msra.mxu0 0
  %594 = vmatprep.subr.bf16.mxu0 0
  %595 = vmatpush1.bf16.msra.mxu0 0
  %596 = vmatprep.mubr.bf16.mxu0 0
  %597 = vmatmul.mubr.bf16.gmra.mrb[0].mxu0 %v562
  %v598 = vpop.f32.mrb[0].mxu0
  %v599 = vadd.f32 0.0, %v598
  %v600 = vpop.f32.mrb[0].mxu0
  %v601 = vpop.f32.mrb[0].mxu0
  %v602 = vpop.f32.mrb[0].mxu0
  %603 = vdwg.mxu0
  %v604 = vadd.f32 %v556, %v599
  %v605 = vxor.u32 %v604, 2147483648
  %v606 = vmul.f32 %v605, 1.442695
  %v607 = vpow.pop %v606
  %v608 = vadd.f32 %v607, 1.0
  %v609 = vrcp.pop %v608
  %v610 = vmul.f32 1.0, %v609
  %v611 = vmul.f32 %v610, 2.0
  %v612 = vsub.f32 %v611, 1.0
  %v613 = vmul.f32 %v610, %v544
  %615 = vrot.lane.b32.xlu0 %v612, 64
  %v616 = vpop.permute.xlu0 %615
  %v618 = vmul.f32 %v610, %v616
  %620 = vrot.lane.b32.xlu0 %v618, 32
  %v621 = vpop.permute.xlu0 %620
  %v623 = vadd.f32 %v613, %v621
  %v624 = vtanh.pop %v623
  %626 = vrot.lane.b32.xlu0 %v624, 64
  %v627 = vpop.permute.xlu0 %626
  %v629 = vmul.f32 %v610, %v627
  %631 = vrot.lane.b32.xlu0 %v629, 32
  %v632 = vpop.permute.xlu0 %631
  %634 = vst.msk [vmem:[#allocation3 + $0x28] sm:$0xff] %vm165, %v632
  %v635 = vld [vmem:[#allocation2 + $0x30] sm:$0xff]
  %v636 = vpack.c.bf16 %v629, %v629
  %638 = vrot.lane.b32.xlu0 %v636, 32
  %v639 = vpop.permute.xlu0 %638
  %v641 = vsel %vm165, %v639, 0
  %643 = vmatprep.subr.bf16.mxu0 0
  %644 = vmatpush1.bf16.msra.mxu0 %v161
  %645 = vmatprep.subr.bf16.mxu0 0
  %646 = vmatpush1.bf16.msra.mxu0 %v162
  %647 = vmatprep.subr.bf16.mxu0 0
  %648 = vmatpush1.bf16.msra.mxu0 0
  %649 = vmatprep.subr.bf16.mxu0 0
  %650 = vmatpush1.bf16.msra.mxu0 0
  %651 = vmatprep.subr.bf16.mxu0 0
  %652 = vmatpush1.bf16.msra.mxu0 0
  %653 = vmatprep.subr.bf16.mxu0 0
  %654 = vmatpush1.bf16.msra.mxu0 0
  %655 = vmatprep.subr.bf16.mxu0 0
  %656 = vmatpush1.bf16.msra.mxu0 0
  %657 = vmatprep.subr.bf16.mxu0 0
  %658 = vmatpush1.bf16.msra.mxu0 0
  %659 = vmatprep.subr.bf16.mxu0 0
  %660 = vmatpush1.bf16.msra.mxu0 0
  %661 = vmatprep.subr.bf16.mxu0 0
  %662 = vmatpush1.bf16.msra.mxu0 0
  %663 = vmatprep.subr.bf16.mxu0 0
  %664 = vmatpush1.bf16.msra.mxu0 0
  %665 = vmatprep.subr.bf16.mxu0 0
  %666 = vmatpush1.bf16.msra.mxu0 0
  %667 = vmatprep.subr.bf16.mxu0 0
  %668 = vmatpush1.bf16.msra.mxu0 0
  %669 = vmatprep.subr.bf16.mxu0 0
  %670 = vmatpush1.bf16.msra.mxu0 0
  %671 = vmatprep.subr.bf16.mxu0 0
  %672 = vmatpush1.bf16.msra.mxu0 0
  %673 = vmatprep.subr.bf16.mxu0 0
  %674 = vmatpush1.bf16.msra.mxu0 0
  %675 = vmatprep.mubr.bf16.mxu0 0
  %676 = vmatmul.mubr.bf16.gmra.mrb[0].mxu0 %v641
  %v677 = vpop.f32.mrb[0].mxu0
  %v678 = vadd.f32 0.0, %v677
  %v679 = vpop.f32.mrb[0].mxu0
  %v680 = vpop.f32.mrb[0].mxu0
  %v681 = vpop.f32.mrb[0].mxu0
  %682 = vdwg.mxu0
  %v683 = vadd.f32 %v635, %v678
  %v684 = vxor.u32 %v683, 2147483648
  %v685 = vmul.f32 %v684, 1.442695
  %v686 = vpow.pop %v685
  %v687 = vadd.f32 %v686, 1.0
  %v688 = vrcp.pop %v687
  %v689 = vmul.f32 1.0, %v688
  %v690 = vmul.f32 %v689, 2.0
  %v691 = vsub.f32 %v690, 1.0
  %v692 = vmul.f32 %v689, %v623
  %694 = vrot.lane.b32.xlu0 %v691, 64
  %v695 = vpop.permute.xlu0 %694
  %v697 = vmul.f32 %v689, %v695
  %699 = vrot.lane.b32.xlu0 %v697, 32
  %v700 = vpop.permute.xlu0 %699
  %v702 = vadd.f32 %v692, %v700
  %v703 = vtanh.pop %v702
  %705 = vrot.lane.b32.xlu0 %v703, 64
  %v706 = vpop.permute.xlu0 %705
  %v708 = vmul.f32 %v689, %v706
  %710 = vrot.lane.b32.xlu0 %v708, 32
  %v711 = vpop.permute.xlu0 %710
  %713 = vst.msk [vmem:[#allocation3 + $0x30] sm:$0xff] %vm165, %v711
  %v714 = vld [vmem:[#allocation2 + $0x38] sm:$0xff]
  %v715 = vpack.c.bf16 %v708, %v708
  %717 = vrot.lane.b32.xlu0 %v715, 32
  %v718 = vpop.permute.xlu0 %717
  %v720 = vsel %vm165, %v718, 0
  %722 = vmatprep.subr.bf16.mxu0 0
  %723 = vmatpush1.bf16.msra.mxu0 %v161
  %724 = vmatprep.subr.bf16.mxu0 0
  %725 = vmatpush1.bf16.msra.mxu0 %v162
  %726 = vmatprep.subr.bf16.mxu0 0
  %727 = vmatpush1.bf16.msra.mxu0 0
  %728 = vmatprep.subr.bf16.mxu0 0
  %729 = vmatpush1.bf16.msra.mxu0 0
  %730 = vmatprep.subr.bf16.mxu0 0
  %731 = vmatpush1.bf16.msra.mxu0 0
  %732 = vmatprep.subr.bf16.mxu0 0
  %733 = vmatpush1.bf16.msra.mxu0 0
  %734 = vmatprep.subr.bf16.mxu0 0
  %735 = vmatpush1.bf16.msra.mxu0 0
  %736 = vmatprep.subr.bf16.mxu0 0
  %737 = vmatpush1.bf16.msra.mxu0 0
  %738 = vmatprep.subr.bf16.mxu0 0
  %739 = vmatpush1.bf16.msra.mxu0 0
  %740 = vmatprep.subr.bf16.mxu0 0
  %741 = vmatpush1.bf16.msra.mxu0 0
  %742 = vmatprep.subr.bf16.mxu0 0
  %743 = vmatpush1.bf16.msra.mxu0 0
  %744 = vmatprep.subr.bf16.mxu0 0
  %745 = vmatpush1.bf16.msra.mxu0 0
  %746 = vmatprep.subr.bf16.mxu0 0
  %747 = vmatpush1.bf16.msra.mxu0 0
  %748 = vmatprep.subr.bf16.mxu0 0
  %749 = vmatpush1.bf16.msra.mxu0 0
  %750 = vmatprep.subr.bf16.mxu0 0
  %751 = vmatpush1.bf16.msra.mxu0 0
  %752 = vmatprep.subr.bf16.mxu0 0
  %753 = vmatpush1.bf16.msra.mxu0 0
  %754 = vmatprep.mubr.bf16.mxu0 0
  %755 = vmatmul.mubr.bf16.gmra.mrb[0].mxu0 %v720
  %v756 = vpop.f32.mrb[0].mxu0
  %v757 = vadd.f32 0.0, %v756
  %v758 = vpop.f32.mrb[0].mxu0
  %v759 = vpop.f32.mrb[0].mxu0
  %v760 = vpop.f32.mrb[0].mxu0
  %761 = vdwg.mxu0
  %v762 = vadd.f32 %v714, %v757
  %v763 = vxor.u32 %v762, 2147483648
  %v764 = vmul.f32 %v763, 1.442695
  %v765 = vpow.pop %v764
  %v766 = vadd.f32 %v765, 1.0
  %v767 = vrcp.pop %v766
  %v768 = vmul.f32 1.0, %v767
  %v769 = vmul.f32 %v768, 2.0
  %v770 = vsub.f32 %v769, 1.0
  %v771 = vmul.f32 %v768, %v702
  %773 = vrot.lane.b32.xlu0 %v770, 64
  %v774 = vpop.permute.xlu0 %773
  %v776 = vmul.f32 %v768, %v774
  %778 = vrot.lane.b32.xlu0 %v776, 32
  %v779 = vpop.permute.xlu0 %778
  %v781 = vadd.f32 %v771, %v779
  %v782 = vtanh.pop %v781
  %784 = vrot.lane.b32.xlu0 %v782, 64
  %v785 = vpop.permute.xlu0 %784
  %v787 = vmul.f32 %v768, %v785
  %789 = vrot.lane.b32.xlu0 %v787, 32
  %v790 = vpop.permute.xlu0 %789
  %792 = vst.msk [vmem:[#allocation3 + $0x38] sm:$0xff] %vm165, %v790
  %v793 = vld [vmem:[#allocation3] sm:$0xff]
  %v794 = vld [vmem:[#allocation3 + $0x8] sm:$0xff]
  %v795 = vld [vmem:[#allocation3 + $0x10] sm:$0xff]
  %v796 = vld [vmem:[#allocation3 + $0x18] sm:$0xff]
  %v797 = vld [vmem:[#allocation3 + $0x20] sm:$0xff]
  %v798 = vld [vmem:[#allocation3 + $0x28] sm:$0xff]
  %v799 = vld [vmem:[#allocation3 + $0x30] sm:$0xff]
  %v800 = vld [vmem:[#allocation3 + $0x38] sm:$0xff]
  %v801 = vpack.c.bf16 %v794, %v793
  %v802 = vpack.c.bf16 %v796, %v795
  %v803 = vpack.c.bf16 %v798, %v797
  %v804 = vpack.c.bf16 %v800, %v799
  %v805 = vld [vmem:[%s4] sm:$0xf]
  %v806 = vld [vmem:[%s4 + $0x4] sm:$0xf]
  %v807 = vld [vmem:[%s4 + $0x8] sm:$0xf]
  %v808 = vld [vmem:[%s4 + $0xc] sm:$0xf]
  %v809 = vld [vmem:[%s6] sm:$0x1]
  %v811 = vlaneseq
  %v812 = vshrl.u32 %v811, 7
  %v813 = vsub.s32 0, %v812
  %v814 = vrot.slane %v809, %v813
  %v820 = vunpack.c.l.b16 %v805
  %v821 = vunpack.c.l.b16 %v806
  %v822 = vunpack.c.l.b16 %v807
  %v823 = vunpack.c.l.b16 %v808
  %v824 = vpack.c.b16 %v821, %v820
  %v825 = vpack.c.b16 %v823, %v822
  %v829 = vsel %vm165, %v801, 0
  %v832 = vsel %vm165, %v802, 0
  %v835 = vsel %vm165, %v803, 0
  %v838 = vsel %vm165, %v804, 0
  %840 = vmatprep.subr.bf16.mxu0 0
  %841 = vmatpush1.bf16.msra.mxu0 %v824
  %842 = vmatprep.subr.bf16.mxu0 0
  %843 = vmatpush1.bf16.msra.mxu0 %v825
  %844 = vmatprep.subr.bf16.mxu0 0
  %845 = vmatpush1.bf16.msra.mxu0 0
  %846 = vmatprep.subr.bf16.mxu0 0
  %847 = vmatpush1.bf16.msra.mxu0 0
  %848 = vmatprep.subr.bf16.mxu0 0
  %849 = vmatpush1.bf16.msra.mxu0 0
  %850 = vmatprep.subr.bf16.mxu0 0
  %851 = vmatpush1.bf16.msra.mxu0 0
  %852 = vmatprep.subr.bf16.mxu0 0
  %853 = vmatpush1.bf16.msra.mxu0 0
  %854 = vmatprep.subr.bf16.mxu0 0
  %855 = vmatpush1.bf16.msra.mxu0 0
  %856 = vmatprep.subr.bf16.mxu0 0
  %857 = vmatpush1.bf16.msra.mxu0 0
  %858 = vmatprep.subr.bf16.mxu0 0
  %859 = vmatpush1.bf16.msra.mxu0 0
  %860 = vmatprep.subr.bf16.mxu0 0
  %861 = vmatpush1.bf16.msra.mxu0 0
  %862 = vmatprep.subr.bf16.mxu0 0
  %863 = vmatpush1.bf16.msra.mxu0 0
  %864 = vmatprep.subr.bf16.mxu0 0
  %865 = vmatpush1.bf16.msra.mxu0 0
  %866 = vmatprep.subr.bf16.mxu0 0
  %867 = vmatpush1.bf16.msra.mxu0 0
  %868 = vmatprep.subr.bf16.mxu0 0
  %869 = vmatpush1.bf16.msra.mxu0 0
  %870 = vmatprep.subr.bf16.mxu0 0
  %871 = vmatpush1.bf16.msra.mxu0 0
  %872 = vmatprep.mubr.bf16.mxu0 0
  %873 = vmatmul.mubr.bf16.gmra.mrb[0].mxu0 %v829
  %v874 = vpop.f32.mrb[0].mxu0
  %v875 = vadd.f32 %v814, %v874
  %v876 = vpop.f32.mrb[0].mxu0
  %v877 = vpop.f32.mrb[0].mxu0
  %v878 = vadd.f32 %v814, %v877
  %v879 = vpop.f32.mrb[0].mxu0
  %880 = vmatprep.mubr.bf16.mxu0 0
  %881 = vmatmul.mubr.bf16.gmra.mrb[0].mxu0 %v832
  %v882 = vpop.f32.mrb[0].mxu0
  %v883 = vadd.f32 %v814, %v882
  %v884 = vpop.f32.mrb[0].mxu0
  %v885 = vpop.f32.mrb[0].mxu0
  %v886 = vadd.f32 %v814, %v885
  %v887 = vpop.f32.mrb[0].mxu0
  %888 = vmatprep.mubr.bf16.mxu0 0
  %889 = vmatmul.mubr.bf16.gmra.mrb[0].mxu0 %v835
  %v890 = vpop.f32.mrb[0].mxu0
  %v891 = vadd.f32 %v814, %v890
  %v892 = vpop.f32.mrb[0].mxu0
  %v893 = vpop.f32.mrb[0].mxu0
  %v894 = vadd.f32 %v814, %v893
  %v895 = vpop.f32.mrb[0].mxu0
  %896 = vmatprep.mubr.bf16.mxu0 0
  %897 = vmatmul.mubr.bf16.gmra.mrb[0].mxu0 %v838
  %v898 = vpop.f32.mrb[0].mxu0
  %v899 = vadd.f32 %v814, %v898
  %v900 = vpop.f32.mrb[0].mxu0
  %v901 = vpop.f32.mrb[0].mxu0
  %v902 = vadd.f32 %v814, %v901
  %v903 = vpop.f32.mrb[0].mxu0
  %904 = vdwg.mxu0
  %905 = vst [vmem:[#allocation2] sm:$0xff] %v875
  %906 = vst [vmem:[#allocation2 + $0x8] sm:$0xff] %v878
  %907 = vst [vmem:[#allocation2 + $0x10] sm:$0xff] %v883
  %908 = vst [vmem:[#allocation2 + $0x18] sm:$0xff] %v886
  %909 = vst [vmem:[#allocation2 + $0x20] sm:$0xff] %v891
  %910 = vst [vmem:[#allocation2 + $0x28] sm:$0xff] %v894
  %911 = vst [vmem:[#allocation2 + $0x30] sm:$0xff] %v899
  %912 = vst [vmem:[#allocation2 + $0x38] sm:$0xff] %v902
  %v913 = vld [vmem:[%s5] sm:$0xf]
  %v914 = vld [vmem:[%s5 + $0x4] sm:$0xf]
  %v915 = vld [vmem:[%s5 + $0x8] sm:$0xf]
  %v916 = vld [vmem:[%s5 + $0xc] sm:$0xf]
  %v917 = vld [vmem:[#allocation2] sm:$0xff]
  %v922 = vunpack.c.l.b16 %v913
  %v923 = vunpack.c.l.b16 %v914
  %v924 = vunpack.c.l.b16 %v915
  %v925 = vunpack.c.l.b16 %v916
  %v926 = vpack.c.b16 %v923, %v922
  %v927 = vpack.c.b16 %v925, %v924
  %930 = vmatprep.subr.bf16.mxu0 0
  %931 = vmatpush1.bf16.msra.mxu0 %v926
  %932 = vmatprep.subr.bf16.mxu0 0
  %933 = vmatpush1.bf16.msra.mxu0 %v927
  %934 = vmatprep.subr.bf16.mxu0 0
  %935 = vmatpush1.bf16.msra.mxu0 0
  %936 = vmatprep.subr.bf16.mxu0 0
  %937 = vmatpush1.bf16.msra.mxu0 0
  %938 = vmatprep.subr.bf16.mxu0 0
  %939 = vmatpush1.bf16.msra.mxu0 0
  %940 = vmatprep.subr.bf16.mxu0 0
  %941 = vmatpush1.bf16.msra.mxu0 0
  %942 = vmatprep.subr.bf16.mxu0 0
  %943 = vmatpush1.bf16.msra.mxu0 0
  %944 = vmatprep.subr.bf16.mxu0 0
  %945 = vmatpush1.bf16.msra.mxu0 0
  %946 = vmatprep.subr.bf16.mxu0 0
  %947 = vmatpush1.bf16.msra.mxu0 0
  %948 = vmatprep.subr.bf16.mxu0 0
  %949 = vmatpush1.bf16.msra.mxu0 0
  %950 = vmatprep.subr.bf16.mxu0 0
  %951 = vmatpush1.bf16.msra.mxu0 0
  %952 = vmatprep.subr.bf16.mxu0 0
  %953 = vmatpush1.bf16.msra.mxu0 0
  %954 = vmatprep.subr.bf16.mxu0 0
  %955 = vmatpush1.bf16.msra.mxu0 0
  %956 = vmatprep.subr.bf16.mxu0 0
  %957 = vmatpush1.bf16.msra.mxu0 0
  %958 = vmatprep.subr.bf16.mxu0 0
  %959 = vmatpush1.bf16.msra.mxu0 0
  %960 = vmatprep.subr.bf16.mxu0 0
  %961 = vmatpush1.bf16.msra.mxu0 0
  %962 = vmatprep.mubr.bf16.mxu0 0
  %963 = vmatmul.mubr.bf16.gmra.mrb[0].mxu0 %v167
  %v964 = vpop.f32.mrb[0].mxu0
  %v965 = vadd.f32 0.0, %v964
  %v966 = vpop.f32.mrb[0].mxu0
  %v967 = vpop.f32.mrb[0].mxu0
  %v968 = vpop.f32.mrb[0].mxu0
  %969 = vdwg.mxu0
  %v970 = vadd.f32 %v917, %v965
  %v971 = vxor.u32 %v970, 2147483648
  %v972 = vmul.f32 %v971, 1.442695
  %v973 = vpow.pop %v972
  %v974 = vadd.f32 %v973, 1.0
  %v975 = vrcp.pop %v974
  %v976 = vmul.f32 1.0, %v975
  %v977 = vmul.f32 %v976, 2.0
  %v978 = vsub.f32 %v977, 1.0
  %v979 = vmul.f32 %v976, 0.0
  %981 = vrot.lane.b32.xlu0 %v978, 64
  %v982 = vpop.permute.xlu0 %981
  %v984 = vmul.f32 %v976, %v982
  %986 = vrot.lane.b32.xlu0 %v984, 32
  %v987 = vpop.permute.xlu0 %986
  %v989 = vadd.f32 %v979, %v987
  %v990 = vtanh.pop %v989
  %992 = vrot.lane.b32.xlu0 %v990, 64
  %v993 = vpop.permute.xlu0 %992
  %v995 = vmul.f32 %v976, %v993
  %v996 = vld [vmem:[#allocation2 + $0x8] sm:$0xff]
  %v997 = vpack.c.bf16 %v995, %v995
  %999 = vrot.lane.b32.xlu0 %v997, 32
  %v1000 = vpop.permute.xlu0 %999
  %v1002 = vsel %vm165, %v1000, 0
  %1004 = vmatprep.subr.bf16.mxu0 0
  %1005 = vmatpush1.bf16.msra.mxu0 %v926
  %1006 = vmatprep.subr.bf16.mxu0 0
  %1007 = vmatpush1.bf16.msra.mxu0 %v927
  %1008 = vmatprep.subr.bf16.mxu0 0
  %1009 = vmatpush1.bf16.msra.mxu0 0
  %1010 = vmatprep.subr.bf16.mxu0 0
  %1011 = vmatpush1.bf16.msra.mxu0 0
  %1012 = vmatprep.subr.bf16.mxu0 0
  %1013 = vmatpush1.bf16.msra.mxu0 0
  %1014 = vmatprep.subr.bf16.mxu0 0
  %1015 = vmatpush1.bf16.msra.mxu0 0
  %1016 = vmatprep.subr.bf16.mxu0 0
  %1017 = vmatpush1.bf16.msra.mxu0 0
  %1018 = vmatprep.subr.bf16.mxu0 0
  %1019 = vmatpush1.bf16.msra.mxu0 0
  %1020 = vmatprep.subr.bf16.mxu0 0
  %1021 = vmatpush1.bf16.msra.mxu0 0
  %1022 = vmatprep.subr.bf16.mxu0 0
  %1023 = vmatpush1.bf16.msra.mxu0 0
  %1024 = vmatprep.subr.bf16.mxu0 0
  %1025 = vmatpush1.bf16.msra.mxu0 0
  %1026 = vmatprep.subr.bf16.mxu0 0
  %1027 = vmatpush1.bf16.msra.mxu0 0
  %1028 = vmatprep.subr.bf16.mxu0 0
  %1029 = vmatpush1.bf16.msra.mxu0 0
  %1030 = vmatprep.subr.bf16.mxu0 0
  %1031 = vmatpush1.bf16.msra.mxu0 0
  %1032 = vmatprep.subr.bf16.mxu0 0
  %1033 = vmatpush1.bf16.msra.mxu0 0
  %1034 = vmatprep.subr.bf16.mxu0 0
  %1035 = vmatpush1.bf16.msra.mxu0 0
  %1036 = vmatprep.mubr.bf16.mxu0 0
  %1037 = vmatmul.mubr.bf16.gmra.mrb[0].mxu0 %v1002
  %v1038 = vpop.f32.mrb[0].mxu0
  %v1039 = vadd.f32 0.0, %v1038
  %v1040 = vpop.f32.mrb[0].mxu0
  %v1041 = vpop.f32.mrb[0].mxu0
  %v1042 = vpop.f32.mrb[0].mxu0
  %1043 = vdwg.mxu0
  %v1044 = vadd.f32 %v996, %v1039
  %v1045 = vxor.u32 %v1044, 2147483648
  %v1046 = vmul.f32 %v1045, 1.442695
  %v1047 = vpow.pop %v1046
  %v1048 = vadd.f32 %v1047, 1.0
  %v1049 = vrcp.pop %v1048
  %v1050 = vmul.f32 1.0, %v1049
  %v1051 = vmul.f32 %v1050, 2.0
  %v1052 = vsub.f32 %v1051, 1.0
  %v1053 = vmul.f32 %v1050, %v989
  %1055 = vrot.lane.b32.xlu0 %v1052, 64
  %v1056 = vpop.permute.xlu0 %1055
  %v1058 = vmul.f32 %v1050, %v1056
  %1060 = vrot.lane.b32.xlu0 %v1058, 32
  %v1061 = vpop.permute.xlu0 %1060
  %v1063 = vadd.f32 %v1053, %v1061
  %v1064 = vtanh.pop %v1063
  %1066 = vrot.lane.b32.xlu0 %v1064, 64
  %v1067 = vpop.permute.xlu0 %1066
  %v1069 = vmul.f32 %v1050, %v1067
  %v1070 = vld [vmem:[#allocation2 + $0x10] sm:$0xff]
  %v1071 = vpack.c.bf16 %v1069, %v1069
  %1073 = vrot.lane.b32.xlu0 %v1071, 32
  %v1074 = vpop.permute.xlu0 %1073
  %v1076 = vsel %vm165, %v1074, 0
  %1078 = vmatprep.subr.bf16.mxu0 0
  %1079 = vmatpush1.bf16.msra.mxu0 %v926
  %1080 = vmatprep.subr.bf16.mxu0 0
  %1081 = vmatpush1.bf16.msra.mxu0 %v927
  %1082 = vmatprep.subr.bf16.mxu0 0
  %1083 = vmatpush1.bf16.msra.mxu0 0
  %1084 = vmatprep.subr.bf16.mxu0 0
  %1085 = vmatpush1.bf16.msra.mxu0 0
  %1086 = vmatprep.subr.bf16.mxu0 0
  %1087 = vmatpush1.bf16.msra.mxu0 0
  %1088 = vmatprep.subr.bf16.mxu0 0
  %1089 = vmatpush1.bf16.msra.mxu0 0
  %1090 = vmatprep.subr.bf16.mxu0 0
  %1091 = vmatpush1.bf16.msra.mxu0 0
  %1092 = vmatprep.subr.bf16.mxu0 0
  %1093 = vmatpush1.bf16.msra.mxu0 0
  %1094 = vmatprep.subr.bf16.mxu0 0
  %1095 = vmatpush1.bf16.msra.mxu0 0
  %1096 = vmatprep.subr.bf16.mxu0 0
  %1097 = vmatpush1.bf16.msra.mxu0 0
  %1098 = vmatprep.subr.bf16.mxu0 0
  %1099 = vmatpush1.bf16.msra.mxu0 0
  %1100 = vmatprep.subr.bf16.mxu0 0
  %1101 = vmatpush1.bf16.msra.mxu0 0
  %1102 = vmatprep.subr.bf16.mxu0 0
  %1103 = vmatpush1.bf16.msra.mxu0 0
  %1104 = vmatprep.subr.bf16.mxu0 0
  %1105 = vmatpush1.bf16.msra.mxu0 0
  %1106 = vmatprep.subr.bf16.mxu0 0
  %1107 = vmatpush1.bf16.msra.mxu0 0
  %1108 = vmatprep.subr.bf16.mxu0 0
  %1109 = vmatpush1.bf16.msra.mxu0 0
  %1110 = vmatprep.mubr.bf16.mxu0 0
  %1111 = vmatmul.mubr.bf16.gmra.mrb[0].mxu0 %v1076
  %v1112 = vpop.f32.mrb[0].mxu0
  %v1113 = vadd.f32 0.0, %v1112
  %v1114 = vpop.f32.mrb[0].mxu0
  %v1115 = vpop.f32.mrb[0].mxu0
  %v1116 = vpop.f32.mrb[0].mxu0
  %1117 = vdwg.mxu0
  %v1118 = vadd.f32 %v1070, %v1113
  %v1119 = vxor.u32 %v1118, 2147483648
  %v1120 = vmul.f32 %v1119, 1.442695
  %v1121 = vpow.pop %v1120
  %v1122 = vadd.f32 %v1121, 1.0
  %v1123 = vrcp.pop %v1122
  %v1124 = vmul.f32 1.0, %v1123
  %v1125 = vmul.f32 %v1124, 2.0
  %v1126 = vsub.f32 %v1125, 1.0
  %v1127 = vmul.f32 %v1124, %v1063
  %1129 = vrot.lane.b32.xlu0 %v1126, 64
  %v1130 = vpop.permute.xlu0 %1129
  %v1132 = vmul.f32 %v1124, %v1130
  %1134 = vrot.lane.b32.xlu0 %v1132, 32
  %v1135 = vpop.permute.xlu0 %1134
  %v1137 = vadd.f32 %v1127, %v1135
  %v1138 = vtanh.pop %v1137
  %1140 = vrot.lane.b32.xlu0 %v1138, 64
  %v1141 = vpop.permute.xlu0 %1140
  %v1143 = vmul.f32 %v1124, %v1141
  %v1144 = vld [vmem:[#allocation2 + $0x18] sm:$0xff]
  %v1145 = vpack.c.bf16 %v1143, %v1143
  %1147 = vrot.lane.b32.xlu0 %v1145, 32
  %v1148 = vpop.permute.xlu0 %1147
  %v1150 = vsel %vm165, %v1148, 0
  %1152 = vmatprep.subr.bf16.mxu0 0
  %1153 = vmatpush1.bf16.msra.mxu0 %v926
  %1154 = vmatprep.subr.bf16.mxu0 0
  %1155 = vmatpush1.bf16.msra.mxu0 %v927
  %1156 = vmatprep.subr.bf16.mxu0 0
  %1157 = vmatpush1.bf16.msra.mxu0 0
  %1158 = vmatprep.subr.bf16.mxu0 0
  %1159 = vmatpush1.bf16.msra.mxu0 0
  %1160 = vmatprep.subr.bf16.mxu0 0
  %1161 = vmatpush1.bf16.msra.mxu0 0
  %1162 = vmatprep.subr.bf16.mxu0 0
  %1163 = vmatpush1.bf16.msra.mxu0 0
  %1164 = vmatprep.subr.bf16.mxu0 0
  %1165 = vmatpush1.bf16.msra.mxu0 0
  %1166 = vmatprep.subr.bf16.mxu0 0
  %1167 = vmatpush1.bf16.msra.mxu0 0
  %1168 = vmatprep.subr.bf16.mxu0 0
  %1169 = vmatpush1.bf16.msra.mxu0 0
  %1170 = vmatprep.subr.bf16.mxu0 0
  %1171 = vmatpush1.bf16.msra.mxu0 0
  %1172 = vmatprep.subr.bf16.mxu0 0
  %1173 = vmatpush1.bf16.msra.mxu0 0
  %1174 = vmatprep.subr.bf16.mxu0 0
  %1175 = vmatpush1.bf16.msra.mxu0 0
  %1176 = vmatprep.subr.bf16.mxu0 0
  %1177 = vmatpush1.bf16.msra.mxu0 0
  %1178 = vmatprep.subr.bf16.mxu0 0
  %1179 = vmatpush1.bf16.msra.mxu0 0
  %1180 = vmatprep.subr.bf16.mxu0 0
  %1181 = vmatpush1.bf16.msra.mxu0 0
  %1182 = vmatprep.subr.bf16.mxu0 0
  %1183 = vmatpush1.bf16.msra.mxu0 0
  %1184 = vmatprep.mubr.bf16.mxu0 0
  %1185 = vmatmul.mubr.bf16.gmra.mrb[0].mxu0 %v1150
  %v1186 = vpop.f32.mrb[0].mxu0
  %v1187 = vadd.f32 0.0, %v1186
  %v1188 = vpop.f32.mrb[0].mxu0
  %v1189 = vpop.f32.mrb[0].mxu0
  %v1190 = vpop.f32.mrb[0].mxu0
  %1191 = vdwg.mxu0
  %v1192 = vadd.f32 %v1144, %v1187
  %v1193 = vxor.u32 %v1192, 2147483648
  %v1194 = vmul.f32 %v1193, 1.442695
  %v1195 = vpow.pop %v1194
  %v1196 = vadd.f32 %v1195, 1.0
  %v1197 = vrcp.pop %v1196
  %v1198 = vmul.f32 1.0, %v1197
  %v1199 = vmul.f32 %v1198, 2.0
  %v1200 = vsub.f32 %v1199, 1.0
  %v1201 = vmul.f32 %v1198, %v1137
  %1203 = vrot.lane.b32.xlu0 %v1200, 64
  %v1204 = vpop.permute.xlu0 %1203
  %v1206 = vmul.f32 %v1198, %v1204
  %1208 = vrot.lane.b32.xlu0 %v1206, 32
  %v1209 = vpop.permute.xlu0 %1208
  %v1211 = vadd.f32 %v1201, %v1209
  %v1212 = vtanh.pop %v1211
  %1214 = vrot.lane.b32.xlu0 %v1212, 64
  %v1215 = vpop.permute.xlu0 %1214
  %v1217 = vmul.f32 %v1198, %v1215
  %v1218 = vld [vmem:[#allocation2 + $0x20] sm:$0xff]
  %v1219 = vpack.c.bf16 %v1217, %v1217
  %1221 = vrot.lane.b32.xlu0 %v1219, 32
  %v1222 = vpop.permute.xlu0 %1221
  %v1224 = vsel %vm165, %v1222, 0
  %1226 = vmatprep.subr.bf16.mxu0 0
  %1227 = vmatpush1.bf16.msra.mxu0 %v926
  %1228 = vmatprep.subr.bf16.mxu0 0
  %1229 = vmatpush1.bf16.msra.mxu0 %v927
  %1230 = vmatprep.subr.bf16.mxu0 0
  %1231 = vmatpush1.bf16.msra.mxu0 0
  %1232 = vmatprep.subr.bf16.mxu0 0
  %1233 = vmatpush1.bf16.msra.mxu0 0
  %1234 = vmatprep.subr.bf16.mxu0 0
  %1235 = vmatpush1.bf16.msra.mxu0 0
  %1236 = vmatprep.subr.bf16.mxu0 0
  %1237 = vmatpush1.bf16.msra.mxu0 0
  %1238 = vmatprep.subr.bf16.mxu0 0
  %1239 = vmatpush1.bf16.msra.mxu0 0
  %1240 = vmatprep.subr.bf16.mxu0 0
  %1241 = vmatpush1.bf16.msra.mxu0 0
  %1242 = vmatprep.subr.bf16.mxu0 0
  %1243 = vmatpush1.bf16.msra.mxu0 0
  %1244 = vmatprep.subr.bf16.mxu0 0
  %1245 = vmatpush1.bf16.msra.mxu0 0
  %1246 = vmatprep.subr.bf16.mxu0 0
  %1247 = vmatpush1.bf16.msra.mxu0 0
  %1248 = vmatprep.subr.bf16.mxu0 0
  %1249 = vmatpush1.bf16.msra.mxu0 0
  %1250 = vmatprep.subr.bf16.mxu0 0
  %1251 = vmatpush1.bf16.msra.mxu0 0
  %1252 = vmatprep.subr.bf16.mxu0 0
  %1253 = vmatpush1.bf16.msra.mxu0 0
  %1254 = vmatprep.subr.bf16.mxu0 0
  %1255 = vmatpush1.bf16.msra.mxu0 0
  %1256 = vmatprep.subr.bf16.mxu0 0
  %1257 = vmatpush1.bf16.msra.mxu0 0
  %1258 = vmatprep.mubr.bf16.mxu0 0
  %1259 = vmatmul.mubr.bf16.gmra.mrb[0].mxu0 %v1224
  %v1260 = vpop.f32.mrb[0].mxu0
  %v1261 = vadd.f32 0.0, %v1260
  %v1262 = vpop.f32.mrb[0].mxu0
  %v1263 = vpop.f32.mrb[0].mxu0
  %v1264 = vpop.f32.mrb[0].mxu0
  %1265 = vdwg.mxu0
  %v1266 = vadd.f32 %v1218, %v1261
  %v1267 = vxor.u32 %v1266, 2147483648
  %v1268 = vmul.f32 %v1267, 1.442695
  %v1269 = vpow.pop %v1268
  %v1270 = vadd.f32 %v1269, 1.0
  %v1271 = vrcp.pop %v1270
  %v1272 = vmul.f32 1.0, %v1271
  %v1273 = vmul.f32 %v1272, 2.0
  %v1274 = vsub.f32 %v1273, 1.0
  %v1275 = vmul.f32 %v1272, %v1211
  %1277 = vrot.lane.b32.xlu0 %v1274, 64
  %v1278 = vpop.permute.xlu0 %1277
  %v1280 = vmul.f32 %v1272, %v1278
  %1282 = vrot.lane.b32.xlu0 %v1280, 32
  %v1283 = vpop.permute.xlu0 %1282
  %v1285 = vadd.f32 %v1275, %v1283
  %v1286 = vtanh.pop %v1285
  %1288 = vrot.lane.b32.xlu0 %v1286, 64
  %v1289 = vpop.permute.xlu0 %1288
  %v1291 = vmul.f32 %v1272, %v1289
  %v1292 = vld [vmem:[#allocation2 + $0x28] sm:$0xff]
  %v1293 = vpack.c.bf16 %v1291, %v1291
  %1295 = vrot.lane.b32.xlu0 %v1293, 32
  %v1296 = vpop.permute.xlu0 %1295
  %v1298 = vsel %vm165, %v1296, 0
  %1300 = vmatprep.subr.bf16.mxu0 0
  %1301 = vmatpush1.bf16.msra.mxu0 %v926
  %1302 = vmatprep.subr.bf16.mxu0 0
  %1303 = vmatpush1.bf16.msra.mxu0 %v927
  %1304 = vmatprep.subr.bf16.mxu0 0
  %1305 = vmatpush1.bf16.msra.mxu0 0
  %1306 = vmatprep.subr.bf16.mxu0 0
  %1307 = vmatpush1.bf16.msra.mxu0 0
  %1308 = vmatprep.subr.bf16.mxu0 0
  %1309 = vmatpush1.bf16.msra.mxu0 0
  %1310 = vmatprep.subr.bf16.mxu0 0
  %1311 = vmatpush1.bf16.msra.mxu0 0
  %1312 = vmatprep.subr.bf16.mxu0 0
  %1313 = vmatpush1.bf16.msra.mxu0 0
  %1314 = vmatprep.subr.bf16.mxu0 0
  %1315 = vmatpush1.bf16.msra.mxu0 0
  %1316 = vmatprep.subr.bf16.mxu0 0
  %1317 = vmatpush1.bf16.msra.mxu0 0
  %1318 = vmatprep.subr.bf16.mxu0 0
  %1319 = vmatpush1.bf16.msra.mxu0 0
  %1320 = vmatprep.subr.bf16.mxu0 0
  %1321 = vmatpush1.bf16.msra.mxu0 0
  %1322 = vmatprep.subr.bf16.mxu0 0
  %1323 = vmatpush1.bf16.msra.mxu0 0
  %1324 = vmatprep.subr.bf16.mxu0 0
  %1325 = vmatpush1.bf16.msra.mxu0 0
  %1326 = vmatprep.subr.bf16.mxu0 0
  %1327 = vmatpush1.bf16.msra.mxu0 0
  %1328 = vmatprep.subr.bf16.mxu0 0
  %1329 = vmatpush1.bf16.msra.mxu0 0
  %1330 = vmatprep.subr.bf16.mxu0 0
  %1331 = vmatpush1.bf16.msra.mxu0 0
  %1332 = vmatprep.mubr.bf16.mxu0 0
  %1333 = vmatmul.mubr.bf16.gmra.mrb[0].mxu0 %v1298
  %v1334 = vpop.f32.mrb[0].mxu0
  %v1335 = vadd.f32 0.0, %v1334
  %v1336 = vpop.f32.mrb[0].mxu0
  %v1337 = vpop.f32.mrb[0].mxu0
  %v1338 = vpop.f32.mrb[0].mxu0
  %1339 = vdwg.mxu0
  %v1340 = vadd.f32 %v1292, %v1335
  %v1341 = vxor.u32 %v1340, 2147483648
  %v1342 = vmul.f32 %v1341, 1.442695
  %v1343 = vpow.pop %v1342
  %v1344 = vadd.f32 %v1343, 1.0
  %v1345 = vrcp.pop %v1344
  %v1346 = vmul.f32 1.0, %v1345
  %v1347 = vmul.f32 %v1346, 2.0
  %v1348 = vsub.f32 %v1347, 1.0
  %v1349 = vmul.f32 %v1346, %v1285
  %1351 = vrot.lane.b32.xlu0 %v1348, 64
  %v1352 = vpop.permute.xlu0 %1351
  %v1354 = vmul.f32 %v1346, %v1352
  %1356 = vrot.lane.b32.xlu0 %v1354, 32
  %v1357 = vpop.permute.xlu0 %1356
  %v1359 = vadd.f32 %v1349, %v1357
  %v1360 = vtanh.pop %v1359
  %1362 = vrot.lane.b32.xlu0 %v1360, 64
  %v1363 = vpop.permute.xlu0 %1362
  %v1365 = vmul.f32 %v1346, %v1363
  %v1366 = vld [vmem:[#allocation2 + $0x30] sm:$0xff]
  %v1367 = vpack.c.bf16 %v1365, %v1365
  %1369 = vrot.lane.b32.xlu0 %v1367, 32
  %v1370 = vpop.permute.xlu0 %1369
  %v1372 = vsel %vm165, %v1370, 0
  %1374 = vmatprep.subr.bf16.mxu0 0
  %1375 = vmatpush1.bf16.msra.mxu0 %v926
  %1376 = vmatprep.subr.bf16.mxu0 0
  %1377 = vmatpush1.bf16.msra.mxu0 %v927
  %1378 = vmatprep.subr.bf16.mxu0 0
  %1379 = vmatpush1.bf16.msra.mxu0 0
  %1380 = vmatprep.subr.bf16.mxu0 0
  %1381 = vmatpush1.bf16.msra.mxu0 0
  %1382 = vmatprep.subr.bf16.mxu0 0
  %1383 = vmatpush1.bf16.msra.mxu0 0
  %1384 = vmatprep.subr.bf16.mxu0 0
  %1385 = vmatpush1.bf16.msra.mxu0 0
  %1386 = vmatprep.subr.bf16.mxu0 0
  %1387 = vmatpush1.bf16.msra.mxu0 0
  %1388 = vmatprep.subr.bf16.mxu0 0
  %1389 = vmatpush1.bf16.msra.mxu0 0
  %1390 = vmatprep.subr.bf16.mxu0 0
  %1391 = vmatpush1.bf16.msra.mxu0 0
  %1392 = vmatprep.subr.bf16.mxu0 0
  %1393 = vmatpush1.bf16.msra.mxu0 0
  %1394 = vmatprep.subr.bf16.mxu0 0
  %1395 = vmatpush1.bf16.msra.mxu0 0
  %1396 = vmatprep.subr.bf16.mxu0 0
  %1397 = vmatpush1.bf16.msra.mxu0 0
  %1398 = vmatprep.subr.bf16.mxu0 0
  %1399 = vmatpush1.bf16.msra.mxu0 0
  %1400 = vmatprep.subr.bf16.mxu0 0
  %1401 = vmatpush1.bf16.msra.mxu0 0
  %1402 = vmatprep.subr.bf16.mxu0 0
  %1403 = vmatpush1.bf16.msra.mxu0 0
  %1404 = vmatprep.subr.bf16.mxu0 0
  %1405 = vmatpush1.bf16.msra.mxu0 0
  %1406 = vmatprep.mubr.bf16.mxu0 0
  %1407 = vmatmul.mubr.bf16.gmra.mrb[0].mxu0 %v1372
  %v1408 = vpop.f32.mrb[0].mxu0
  %v1409 = vadd.f32 0.0, %v1408
  %v1410 = vpop.f32.mrb[0].mxu0
  %v1411 = vpop.f32.mrb[0].mxu0
  %v1412 = vpop.f32.mrb[0].mxu0
  %1413 = vdwg.mxu0
  %v1414 = vadd.f32 %v1366, %v1409
  %v1415 = vxor.u32 %v1414, 2147483648
  %v1416 = vmul.f32 %v1415, 1.442695
  %v1417 = vpow.pop %v1416
  %v1418 = vadd.f32 %v1417, 1.0
  %v1419 = vrcp.pop %v1418
  %v1420 = vmul.f32 1.0, %v1419
  %v1421 = vmul.f32 %v1420, 2.0
  %v1422 = vsub.f32 %v1421, 1.0
  %v1423 = vmul.f32 %v1420, %v1359
  %1425 = vrot.lane.b32.xlu0 %v1422, 64
  %v1426 = vpop.permute.xlu0 %1425
  %v1428 = vmul.f32 %v1420, %v1426
  %1430 = vrot.lane.b32.xlu0 %v1428, 32
  %v1431 = vpop.permute.xlu0 %1430
  %v1433 = vadd.f32 %v1423, %v1431
  %v1434 = vtanh.pop %v1433
  %1436 = vrot.lane.b32.xlu0 %v1434, 64
  %v1437 = vpop.permute.xlu0 %1436
  %v1439 = vmul.f32 %v1420, %v1437
  %v1440 = vld [vmem:[#allocation2 + $0x38] sm:$0xff]
  %v1441 = vpack.c.bf16 %v1439, %v1439
  %1443 = vrot.lane.b32.xlu0 %v1441, 32
  %v1444 = vpop.permute.xlu0 %1443
  %v1446 = vsel %vm165, %v1444, 0
  %1448 = vmatprep.subr.bf16.mxu0 0
  %1449 = vmatpush1.bf16.msra.mxu0 %v926
  %1450 = vmatprep.subr.bf16.mxu0 0
  %1451 = vmatpush1.bf16.msra.mxu0 %v927
  %1452 = vmatprep.subr.bf16.mxu0 0
  %1453 = vmatpush1.bf16.msra.mxu0 0
  %1454 = vmatprep.subr.bf16.mxu0 0
  %1455 = vmatpush1.bf16.msra.mxu0 0
  %1456 = vmatprep.subr.bf16.mxu0 0
  %1457 = vmatpush1.bf16.msra.mxu0 0
  %1458 = vmatprep.subr.bf16.mxu0 0
  %1459 = vmatpush1.bf16.msra.mxu0 0
  %1460 = vmatprep.subr.bf16.mxu0 0
  %1461 = vmatpush1.bf16.msra.mxu0 0
  %1462 = vmatprep.subr.bf16.mxu0 0
  %1463 = vmatpush1.bf16.msra.mxu0 0
  %1464 = vmatprep.subr.bf16.mxu0 0
  %1465 = vmatpush1.bf16.msra.mxu0 0
  %1466 = vmatprep.subr.bf16.mxu0 0
  %1467 = vmatpush1.bf16.msra.mxu0 0
  %1468 = vmatprep.subr.bf16.mxu0 0
  %1469 = vmatpush1.bf16.msra.mxu0 0
  %1470 = vmatprep.subr.bf16.mxu0 0
  %1471 = vmatpush1.bf16.msra.mxu0 0
  %1472 = vmatprep.subr.bf16.mxu0 0
  %1473 = vmatpush1.bf16.msra.mxu0 0
  %1474 = vmatprep.subr.bf16.mxu0 0
  %1475 = vmatpush1.bf16.msra.mxu0 0
  %1476 = vmatprep.subr.bf16.mxu0 0
  %1477 = vmatpush1.bf16.msra.mxu0 0
  %1478 = vmatprep.subr.bf16.mxu0 0
  %1479 = vmatpush1.bf16.msra.mxu0 0
  %1480 = vmatprep.mubr.bf16.mxu0 0
  %1481 = vmatmul.mubr.bf16.gmra.mrb[0].mxu0 %v1446
  %v1482 = vpop.f32.mrb[0].mxu0
  %v1483 = vadd.f32 0.0, %v1482
  %v1484 = vpop.f32.mrb[0].mxu0
  %v1485 = vpop.f32.mrb[0].mxu0
  %v1486 = vpop.f32.mrb[0].mxu0
  %1487 = vdwg.mxu0
  %v1488 = vadd.f32 %v1440, %v1483
  %v1489 = vxor.u32 %v1488, 2147483648
  %v1490 = vmul.f32 %v1489, 1.442695
  %v1491 = vpow.pop %v1490
  %v1492 = vadd.f32 %v1491, 1.0
  %v1493 = vrcp.pop %v1492
  %v1494 = vmul.f32 1.0, %v1493
  %v1495 = vmul.f32 %v1494, 2.0
  %v1496 = vsub.f32 %v1495, 1.0
  %v1497 = vmul.f32 %v1494, %v1433
  %1499 = vrot.lane.b32.xlu0 %v1496, 64
  %v1500 = vpop.permute.xlu0 %1499
  %v1502 = vmul.f32 %v1494, %v1500
  %1504 = vrot.lane.b32.xlu0 %v1502, 32
  %v1505 = vpop.permute.xlu0 %1504
  %v1507 = vadd.f32 %v1497, %v1505
  %v1508 = vtanh.pop %v1507
  %1510 = vrot.lane.b32.xlu0 %v1508, 64
  %v1511 = vpop.permute.xlu0 %1510
  %v1513 = vmul.f32 %v1494, %v1511
  %v1514 = vpack.c.bf16 %v1513, %v1513
  %v1515 = vld [vmem:[%s7] sm:$0xf]
  %v1516 = vld [vmem:[%s7 + $0x4] sm:$0xf]
  %v1517 = vld [vmem:[%s7 + $0x8] sm:$0xf]
  %v1518 = vld [vmem:[%s7 + $0xc] sm:$0xf]
  %v1519 = vld [vmem:[#allocation4] sm:$0x1]
  %v1521 = vlaneseq
  %v1522 = vshrl.u32 %v1521, 7
  %v1523 = vsub.s32 0, %v1522
  %v1524 = vrot.slane %v1519, %v1523
  %1527 = vrot.lane.b32.xlu0 %v1514, 32
  %v1528 = vpop.permute.xlu0 %1527
  %v1533 = vunpack.c.l.b16 %v1515
  %v1534 = vunpack.c.l.b16 %v1516
  %v1535 = vunpack.c.l.b16 %v1517
  %v1536 = vunpack.c.l.b16 %v1518
  %v1537 = vpack.c.b16 %v1534, %v1533
  %v1538 = vpack.c.b16 %v1536, %v1535
  %v1542 = vsel %vm165, %v1528, 0
  %1544 = vmatprep.subr.bf16.mxu0 0
  %1545 = vmatpush1.bf16.msra.mxu0 %v1537
  %1546 = vmatprep.subr.bf16.mxu0 0
  %1547 = vmatpush1.bf16.msra.mxu0 %v1538
  %1548 = vmatprep.subr.bf16.mxu0 0
  %1549 = vmatpush1.bf16.msra.mxu0 0
  %1550 = vmatprep.subr.bf16.mxu0 0
  %1551 = vmatpush1.bf16.msra.mxu0 0
  %1552 = vmatprep.subr.bf16.mxu0 0
  %1553 = vmatpush1.bf16.msra.mxu0 0
  %1554 = vmatprep.subr.bf16.mxu0 0
  %1555 = vmatpush1.bf16.msra.mxu0 0
  %1556 = vmatprep.subr.bf16.mxu0 0
  %1557 = vmatpush1.bf16.msra.mxu0 0
  %1558 = vmatprep.subr.bf16.mxu0 0
  %1559 = vmatpush1.bf16.msra.mxu0 0
  %1560 = vmatprep.subr.bf16.mxu0 0
  %1561 = vmatpush1.bf16.msra.mxu0 0
  %1562 = vmatprep.subr.bf16.mxu0 0
  %1563 = vmatpush1.bf16.msra.mxu0 0
  %1564 = vmatprep.subr.bf16.mxu0 0
  %1565 = vmatpush1.bf16.msra.mxu0 0
  %1566 = vmatprep.subr.bf16.mxu0 0
  %1567 = vmatpush1.bf16.msra.mxu0 0
  %1568 = vmatprep.subr.bf16.mxu0 0
  %1569 = vmatpush1.bf16.msra.mxu0 0
  %1570 = vmatprep.subr.bf16.mxu0 0
  %1571 = vmatpush1.bf16.msra.mxu0 0
  %1572 = vmatprep.subr.bf16.mxu0 0
  %1573 = vmatpush1.bf16.msra.mxu0 0
  %1574 = vmatprep.subr.bf16.mxu0 0
  %1575 = vmatpush1.bf16.msra.mxu0 0
  %1576 = vmatprep.mubr.bf16.mxu0 0
  %1577 = vmatmul.mubr.bf16.gmra.mrb[0].mxu0 %v1542
  %v1578 = vpop.f32.mrb[0].mxu0
  %v1579 = vadd.f32 %v1524, %v1578
  %v1580 = vpop.f32.mrb[0].mxu0
  %v1581 = vpop.f32.mrb[0].mxu0
  %v1582 = vpop.f32.mrb[0].mxu0
  %1583 = vdwg.mxu0
  %vm1584 = vcmask 7168
  %1585 = vst.msk [vmem:[%s9] sm:$0xff] %vm1584, %v1579
  // Predicated region
  $region38: #{_lambda_.1} parent=0 // pred_check
    _
  $region39: #{_lambda_.1} parent=0 // pred_check_branch
    %1587 = sbr.rel (0) target = $region41
  $region40: #{_lambda_.1} parent=0 // pred_region
    _
  $region41: #{_lambda_.1} parent=0 // pred_fallthru
    _
  // Predicated region
  $region42: #{_lambda_.1} parent=0 // pred_check
    _
  $region43: #{_lambda_.1} parent=0 // pred_check_branch
    %1589 = sbr.rel (0) target = $region45
  $region44: #{_lambda_.1} parent=0 // pred_region
    _
  $region45: #{_lambda_.1} parent=0 // pred_fallthru
    _

</llo_original>
